<compile_context>
chip_gen: v5e
topology: v5e:2x2
jax: 0.10.0
libtpu: 0.0.40
codegen_flags: <defaults>
</compile_context>

<pallas_src>
import jax
import jax.numpy as jnp
from jax.experimental import pallas as pl
from jax.experimental.pallas import tpu as pltpu

# ----------------------------- configs (small, synthetic) -----------------------------
INPUT_CHANNELS = 4
KERNEL_SIZE = 8
STRIDE = 1                     # fused shifted-matmul conv assumes stride 1
FINAL_OUT_CHANNELS = 16
SEQ_LEN = 16
BATCH = 2
BN_EPS = 1e-5

PAD = KERNEL_SIZE // 2                   # 4
LANES = 128                              # conv output-channel dims padded to one lane width
ROWS_PER_BATCH = SEQ_LEN + 2 * PAD       # 24 rows per batch (covers every stage's padding)
HALF_ROWS = ROWS_PER_BATCH // 2          # 12
CIN_PADS = (16, 32, 64)                  # de-padded contraction (Cin) dims per conv block


def _stage_lengths():
    lens, L = [], SEQ_LEN
    for _ in range(3):
        Lc = L + 2 * PAD - KERNEL_SIZE + 1   # stride-1 conv output length
        Lp = Lc // 2 + 1                     # maxpool k=2, s=2, p=1
        lens.append((L, Lc, Lp))
        L = Lp
    return lens


_STAGES = _stage_lengths()                   # [(16,17,9), (9,10,6), (6,7,4)]
CNN_OUT_LEN = _STAGES[-1][2]                 # 4  (== configs.CNNoutput_channel)
FEAT = CNN_OUT_LEN * FINAL_OUT_CHANNELS      # 64


# ----------------------------- the fused Pallas kernel -----------------------------
def _tfc_fused_kernel(x_ref, wc1_ref, wc2_ref, wc3_ref, bc_ref,
                      wd1_ref, bd1_ref, wd2_ref, bd2_ref,
                      p3_ref, z_ref, s1, s2, y_scr):
    # x_ref  : (48, 16)  bf16  channels-last input, conv zero-padding rows included
    # wc*_ref: (8, Cin_pad, 128) bf16  per-tap conv weights (BN scale folded), Cin de-padded
    # bc_ref : (3, 128)  f32   folded BN biases, one row per conv block
    # wd1_ref: (64, 256) bf16  dense-1 weight (BN folded, rows reordered to (t, c))
    # bd1_ref: (1, 256) f32 ; wd2_ref: (256, 128) bf16 ; bd2_ref: (1, 128) f32
    # p3_ref : (B*4, 128) f32  pooled block-3 output rows, ordered (batch, t)
    # z_ref  : (B, 128) f32
    # s1, s2 : (48, 128) f32  pooled activations embedded in zero-padded 24-row slabs
    # y_scr  : (48, 128) f32  pre-pool conv output staging (for the strided pooling reads)
    R = ROWS_PER_BATCH

    # The zero rows of s1/s2 double as the next conv's left/right padding.
    s1[...] = jnp.zeros_like(s1)
    s2[...] = jnp.zeros_like(s2)

    def conv_block(a_full, w_ref, blk, l_in):
        """Conv1d(k=8,s=1,p=4, BN folded) + ReLU + MaxPool1d(2,2,1), batched over both batches.

        a_full : (48, Cin_pad) bf16 value (both batch slabs, channels-last)
        returns: ((12 + out_len, 128) f32, out_len); batch-0 pooled rows at [0, out_len),
                 batch-1 pooled rows at [12, 12 + out_len).
        """
        l_conv = l_in + 1
        out_len = l_conv // 2 + 1
        n_acc = (BATCH - 1) * R + l_conv           # both batches' conv rows (+ junk between)

        # 8 full-height tap matmuls, shift-accumulated: acc[t] = sum_k a_full[t+k] @ W_k.
        acc = None
        for k in range(KERNEL_SIZE):
            p_k = jnp.dot(a_full, w_ref[k], preferred_element_type=jnp.float32)   # (48, 128)
            p_k = p_k[k:k + n_acc, :]
            acc = p_k if acc is None else acc + p_k
        y = jnp.maximum(acc + bc_ref[blk:blk + 1, :], 0.0)       # bias + ReLU (f32, >= 0)

        # MaxPool1d(k=2, s=2, p=1): stage y with one leading zero row (and a trailing zero
        # row where needed) so pooled[t] = max(stage[2t], stage[2t+1]).  0-padding is
        # equivalent to -inf padding only because ReLU precedes the pool (values >= 0).
        zrow = jnp.zeros((1, LANES), jnp.float32)
        tail = 2 * out_len - 1 - l_conv                          # 0 or 1 extra zero rows
        for b in range(BATCH):
            pieces = [zrow, y[b * R:b * R + l_conv, :]]
            if tail:
                pieces.append(jnp.zeros((tail, LANES), jnp.float32))
            y_scr[b * R:b * R + 2 * out_len, :] = jnp.concatenate(pieces, axis=0)
        nrows = HALF_ROWS + out_len
        ev = y_scr[pl.ds(0, nrows, stride=2), :]                 # rows 0, 2, 4, ...
        od = y_scr[pl.ds(1, nrows, stride=2), :]                 # rows 1, 3, 5, ...
        return jnp.maximum(ev, od), out_len

    # block 1: x -> s1   (Dropout after block 1 is identity at inference)
    m1, n1 = conv_block(x_ref[...], wc1_ref, 0, _STAGES[0][0])
    for b in range(BATCH):
        s1[b * R + PAD:b * R + PAD + n1, :] = m1[b * HALF_ROWS:b * HALF_ROWS + n1, :]

    # block 2: s1 -> s2   (cast activations to bf16 once per block)
    a2 = s1[:, :CIN_PADS[1]].astype(jnp.bfloat16)
    m2, n2 = conv_block(a2, wc2_ref, 1, _STAGES[1][0])
    for b in range(BATCH):
        s2[b * R + PAD:b * R + PAD + n2, :] = m2[b * HALF_ROWS:b * HALF_ROWS + n2, :]

    # block 3: s2 -> p3 output (rows ordered (batch, t); only lanes < 16 are meaningful)
    a3 = s2[:, :CIN_PADS[2]].astype(jnp.bfloat16)
    m3, n3 = conv_block(a3, wc3_ref, 2, _STAGES[2][0])
    for b in range(BATCH):
        p3_ref[b * n3:(b + 1) * n3, :] = m3[b * HALF_ROWS:b * HALF_ROWS + n3, :]

    # dense head: lane-pack the 4 pooled rows per batch into one (B, 64) operand
    # ((t, c)-ordered to match the reordered W1), then two matmuls with M = B.
    hs = []
    for b in range(BATCH):
        off = b * HALF_ROWS
        hs.append(jnp.concatenate(
            [m3[off + t:off + t + 1, :FINAL_OUT_CHANNELS] for t in range(n3)], axis=1))
    H = jnp.concatenate(hs, axis=0).astype(jnp.bfloat16)         # (B, 64)
    y1 = jnp.maximum(
        jnp.dot(H, wd1_ref[...], preferred_element_type=jnp.float32) + bd1_ref[...], 0.0)
    z = jnp.dot(y1.astype(jnp.bfloat16), wd2_ref[...],
                preferred_element_type=jnp.float32) + bd2_ref[...]
    z_ref[...] = z


_VMEM = pl.BlockSpec(memory_space=pltpu.MemorySpace.VMEM)


# ----------------------------- one-time parameter folding / packing -----------------------------
def _fold_conv_block(w, bn, cin_pad):
    # w: (Cout, Cin, K). Fold eval-mode BN scale into the weights; bias stays separate.
    cout, cin, _ = w.shape
    inv_std = 1.0 / jnp.sqrt(bn["var"] + BN_EPS)
    scale = bn["gamma"] * inv_std
    bias = bn["beta"] - bn["mean"] * scale
    wf = w * scale[:, None, None]
    wk = jnp.transpose(wf, (2, 1, 0))                                  # (K, Cin, Cout)
    wk = jnp.pad(wk, ((0, 0), (0, cin_pad - cin), (0, LANES - cout)))  # de-padded K, N -> 128
    b = jnp.pad(bias, (0, LANES - cout)).reshape(1, LANES)
    return wk.astype(jnp.bfloat16), b.astype(jnp.float32)


def _fold_dense(p):
    inv_std = 1.0 / jnp.sqrt(p["bn_var"] + BN_EPS)
    s = p["bn_gamma"] * inv_std
    w1f = p["w1"] * s[None, :]                                         # (64, 256)
    b1f = p["b1"] * s + (p["bn_beta"] - p["bn_mean"] * s)              # (256,)
    # h[b, c*T + t] == pooled3[b, t, c]  ->  reorder W1 rows so the kernel packs by (t, c)
    w1r = (w1f.reshape(FINAL_OUT_CHANNELS, CNN_OUT_LEN, 256)
              .transpose(1, 0, 2).reshape(FEAT, 256))                  # rows ordered t*16 + c
    return (w1r.astype(jnp.bfloat16),
            b1f.reshape(1, 256).astype(jnp.float32),
            p["w2"].astype(jnp.bfloat16),
            p["b2"].reshape(1, 128).astype(jnp.float32))


def prepare_params(params):
    """Fold BN into weights, de-pad / reorder / cast once per model (hoisted out of forward)."""
    wc1, bc1 = _fold_conv_block(params["conv1_w"], params["bn1"], CIN_PADS[0])
    wc2, bc2 = _fold_conv_block(params["conv2_w"], params["bn2"], CIN_PADS[1])
    wc3, bc3 = _fold_conv_block(params["conv3_w"], params["bn3"], CIN_PADS[2])
    wd1, bd1, wd2, bd2 = _fold_dense(params["dense"])
    return dict(wc1=wc1, wc2=wc2, wc3=wc3,
                bc=jnp.concatenate([bc1, bc2, bc3], axis=0),           # (3, 128)
                wd1=wd1, bd1=bd1, wd2=wd2, bd2=bd2)


# ----------------------------- forward -----------------------------
def tfc_forward(packed, x_in_t):
    # x_in_t: (B, input_channels, seq_len) NCW f32  ->  (h, z)
    assert STRIDE == 1  # TODO(synk): general conv stride not needed for this config
    assert x_in_t.shape == (BATCH, INPUT_CHANNELS, SEQ_LEN)

    # Tiny input layout prep: NCW -> channels-last, conv zero-pad rows, channel pad to 16 lanes.
    xcl = jnp.transpose(x_in_t, (0, 2, 1))                             # (B, L, Cin)
    xcl = jnp.pad(xcl, ((0, 0), (PAD, PAD), (0, CIN_PADS[0] - INPUT_CHANNELS)))
    x2d = xcl.reshape(BATCH * ROWS_PER_BATCH, CIN_PADS[0]).astype(jnp.bfloat16)

    p3, z = pl.pallas_call(
        _tfc_fused_kernel,
        out_shape=(jax.ShapeDtypeStruct((BATCH * CNN_OUT_LEN, LANES), jnp.float32),
                   jax.ShapeDtypeStruct((BATCH, LANES), jnp.float32)),
        in_specs=[_VMEM] * 9,
        out_specs=(_VMEM, _VMEM),
        scratch_shapes=[pltpu.VMEM((BATCH * ROWS_PER_BATCH, LANES), jnp.float32),
                        pltpu.VMEM((BATCH * ROWS_PER_BATCH, LANES), jnp.float32),
                        pltpu.VMEM((BATCH * ROWS_PER_BATCH, LANES), jnp.float32)],
    )(x2d, packed["wc1"], packed["wc2"], packed["wc3"], packed["bc"],
      packed["wd1"], packed["bd1"], packed["wd2"], packed["bd2"])

    # h matches torch's x.reshape(B, -1) on the NCW block-3 output: h[b, c*T + t]
    h = (p3[:, :FINAL_OUT_CHANNELS].reshape(BATCH, CNN_OUT_LEN, FINAL_OUT_CHANNELS)
           .transpose(0, 2, 1).reshape(BATCH, FEAT))
    return h, z


# ----------------------------- pure-JAX reference (correctness check) -----------------------------
def _ref_forward(params, x):
    def block(x, w, bn):
        y = jax.lax.conv_general_dilated(
            x, w, window_strides=(1,), padding=[(PAD, PAD)],
            dimension_numbers=("NCH", "OIH", "NCH"))
        inv = 1.0 / jnp.sqrt(bn["var"] + BN_EPS)
        y = ((y - bn["mean"][None, :, None]) * (bn["gamma"] * inv)[None, :, None]
             + bn["beta"][None, :, None])
        y = jnp.maximum(y, 0.0)
        L = y.shape[-1]
        out_len = L // 2 + 1
        yp = jnp.pad(y, ((0, 0), (0, 0), (1, 2 * out_len - L - 1)),
                     constant_values=-jnp.inf)
        return jnp.maximum(yp[:, :, 0::2], yp[:, :, 1::2])

    x = block(x, params["conv1_w"], params["bn1"])
    x = block(x, params["conv2_w"], params["bn2"])
    x = block(x, params["conv3_w"], params["bn3"])
    h = x.reshape(x.shape[0], -1)
    d = params["dense"]
    inv = 1.0 / jnp.sqrt(d["bn_var"] + BN_EPS)
    y = h @ d["w1"] + d["b1"]
    y = (y - d["bn_mean"]) * (d["bn_gamma"] * inv) + d["bn_beta"]
    y = jnp.maximum(y, 0.0)
    return h, y @ d["w2"] + d["b2"]


# ----------------------------- parameter init (deterministic) -----------------------------
def _bn_params(key, c):
    k1, k2, k3, k4 = jax.random.split(key, 4)
    return dict(
        gamma=1.0 + 0.1 * jax.random.normal(k1, (c,), jnp.float32),
        beta=0.1 * jax.random.normal(k2, (c,), jnp.float32),
        mean=0.1 * jax.random.normal(k3, (c,), jnp.float32),
        var=1.0 + 0.1 * jnp.abs(jax.random.normal(k4, (c,), jnp.float32)),
    )


def init_params(key):
    keys = jax.random.split(key, 12)
    params = {}
    params["conv1_w"] = 0.1 * jax.random.normal(keys[0], (32, INPUT_CHANNELS, KERNEL_SIZE), jnp.float32)
    params["bn1"] = _bn_params(keys[1], 32)
    params["conv2_w"] = 0.1 * jax.random.normal(keys[2], (64, 32, 8), jnp.float32)
    params["bn2"] = _bn_params(keys[3], 64)
    params["conv3_w"] = 0.1 * jax.random.normal(keys[4], (FINAL_OUT_CHANNELS, 64, 8), jnp.float32)
    params["bn3"] = _bn_params(keys[5], FINAL_OUT_CHANNELS)
    dbn = _bn_params(keys[6], 256)
    params["dense"] = dict(
        w1=0.1 * jax.random.normal(keys[7], (FEAT, 256), jnp.float32),
        b1=0.1 * jax.random.normal(keys[8], (256,), jnp.float32),
        bn_gamma=dbn["gamma"], bn_beta=dbn["beta"], bn_mean=dbn["mean"], bn_var=dbn["var"],
        w2=0.1 * jax.random.normal(keys[9], (256, 128), jnp.float32),
        b2=0.1 * jax.random.normal(keys[10], (128,), jnp.float32),
    )
    return params


if __name__ == "__main__":
    key = jax.random.PRNGKey(0)
    pkey, xkey = jax.random.split(key)
    params = init_params(pkey)
    x_in_t = jax.random.normal(xkey, (BATCH, INPUT_CHANNELS, SEQ_LEN), jnp.float32)

    packed = prepare_params(params)          # one-time folding/packing (outside the hot path)
    fwd = jax.jit(tfc_forward)
    h, z = fwd(packed, x_in_t)
    jax.block_until_ready((h, z))

    assert h.shape == (BATCH, FEAT), h.shape
    assert z.shape == (BATCH, 128), z.shape
    assert bool(jnp.all(jnp.isfinite(h))) and bool(jnp.all(jnp.isfinite(z)))

    # correctness vs. pure-JAX reference (generous tolerance: kernel uses bf16 MXU operands)
    h_want, z_want = _ref_forward(params, x_in_t)
    assert bool(jnp.allclose(h, h_want, atol=1e-1, rtol=1e-1))
    assert bool(jnp.allclose(z, z_want, atol=1e-1, rtol=1e-1))

    print("KERNEL_OK")
</pallas_src>

<mosaic_0001>
module attributes {stable_mosaic.version = 11 : i64} {
  func.func @_tfc_fused_kernel(%arg0: memref<48x16xbf16, #tpu.memory_space<vmem>>, %arg1: memref<8x16x128xbf16, #tpu.memory_space<vmem>>, %arg2: memref<8x32x128xbf16, #tpu.memory_space<vmem>>, %arg3: memref<8x64x128xbf16, #tpu.memory_space<vmem>>, %arg4: memref<3x128xf32, #tpu.memory_space<vmem>>, %arg5: memref<64x256xbf16, #tpu.memory_space<vmem>>, %arg6: memref<1x256xf32, #tpu.memory_space<vmem>>, %arg7: memref<256x128xbf16, #tpu.memory_space<vmem>>, %arg8: memref<1x128xf32, #tpu.memory_space<vmem>>, %arg9: memref<8x128xf32, #tpu.memory_space<vmem>>, %arg10: memref<2x128xf32, #tpu.memory_space<vmem>>, %arg11: memref<48x128xf32, #tpu.memory_space<vmem>>, %arg12: memref<48x128xf32, #tpu.memory_space<vmem>>, %arg13: memref<48x128xf32, #tpu.memory_space<vmem>>) attributes {dimension_semantics = [], scalar_prefetch = 0 : i64, scratch_operands = 3 : i64, tpu.core_type = #tpu.core_type<tc>} {
    %cst = arith.constant 0.000000e+00 : f32
    %0 = vector.broadcast %cst : f32 to vector<48x128xf32>
    %c0 = arith.constant 0 : index
    %c0_0 = arith.constant 0 : index
    %1 = vector.load %arg11[%c0, %c0_0] : memref<48x128xf32, #tpu.memory_space<vmem>>, vector<48x128xf32>
    tpu.vector_store %arg11[%c0, %c0_0], %0 {strides = array<i32>} : memref<48x128xf32, #tpu.memory_space<vmem>>, vector<48x128xf32>,
    %cst_1 = arith.constant 0.000000e+00 : f32
    %2 = vector.broadcast %cst_1 : f32 to vector<48x128xf32>
    %c0_2 = arith.constant 0 : index
    %c0_3 = arith.constant 0 : index
    %3 = vector.load %arg12[%c0_2, %c0_3] : memref<48x128xf32, #tpu.memory_space<vmem>>, vector<48x128xf32>
    tpu.vector_store %arg12[%c0_2, %c0_3], %2 {strides = array<i32>} : memref<48x128xf32, #tpu.memory_space<vmem>>, vector<48x128xf32>,
    %c0_4 = arith.constant 0 : index
    %c0_5 = arith.constant 0 : index
    %4 = vector.load %arg0[%c0_4, %c0_5] : memref<48x16xbf16, #tpu.memory_space<vmem>>, vector<48x16xbf16>
    %c0_6 = arith.constant 0 : index
    %c0_7 = arith.constant 0 : index
    %c0_8 = arith.constant 0 : index
    %5 = vector.load %arg1[%c0_6, %c0_7, %c0_8] : memref<8x16x128xbf16, #tpu.memory_space<vmem>>, vector<1x16x128xbf16>
    %6 = vector.shape_cast %5 : vector<1x16x128xbf16> to vector<16x128xbf16>
    %cst_9 = arith.constant dense<0.000000e+00> : vector<48x128xf32>
    %7 = tpu.matmul %4, %6, %cst_9 {dimension_numbers = #tpu.dot_dimension_numbers<[1], [0], [0], [1], [0, 0, 1, 1], [], []>} : vector<48x16xbf16>, vector<16x128xbf16>, vector<48x128xf32> -> vector<48x128xf32>
    %8 = vector.extract_strided_slice %7 {offsets = [0, 0], sizes = [41, 128], strides = [1, 1]} : vector<48x128xf32> to vector<41x128xf32>
    %c1 = arith.constant 1 : index
    %c0_10 = arith.constant 0 : index
    %c0_11 = arith.constant 0 : index
    %9 = vector.load %arg1[%c1, %c0_10, %c0_11] : memref<8x16x128xbf16, #tpu.memory_space<vmem>>, vector<1x16x128xbf16>
    %10 = vector.shape_cast %9 : vector<1x16x128xbf16> to vector<16x128xbf16>
    %cst_12 = arith.constant dense<0.000000e+00> : vector<48x128xf32>
    %11 = tpu.matmul %4, %10, %cst_12 {dimension_numbers = #tpu.dot_dimension_numbers<[1], [0], [0], [1], [0, 0, 1, 1], [], []>} : vector<48x16xbf16>, vector<16x128xbf16>, vector<48x128xf32> -> vector<48x128xf32>
    %12 = vector.extract_strided_slice %11 {offsets = [1, 0], sizes = [41, 128], strides = [1, 1]} : vector<48x128xf32> to vector<41x128xf32>
    %13 = arith.addf %8, %12 : vector<41x128xf32>
    %c2 = arith.constant 2 : index
    %c0_13 = arith.constant 0 : index
    %c0_14 = arith.constant 0 : index
    %14 = vector.load %arg1[%c2, %c0_13, %c0_14] : memref<8x16x128xbf16, #tpu.memory_space<vmem>>, vector<1x16x128xbf16>
    %15 = vector.shape_cast %14 : vector<1x16x128xbf16> to vector<16x128xbf16>
    %cst_15 = arith.constant dense<0.000000e+00> : vector<48x128xf32>
    %16 = tpu.matmul %4, %15, %cst_15 {dimension_numbers = #tpu.dot_dimension_numbers<[1], [0], [0], [1], [0, 0, 1, 1], [], []>} : vector<48x16xbf16>, vector<16x128xbf16>, vector<48x128xf32> -> vector<48x128xf32>
    %17 = vector.extract_strided_slice %16 {offsets = [2, 0], sizes = [41, 128], strides = [1, 1]} : vector<48x128xf32> to vector<41x128xf32>
    %18 = arith.addf %13, %17 : vector<41x128xf32>
    %c3 = arith.constant 3 : index
    %c0_16 = arith.constant 0 : index
    %c0_17 = arith.constant 0 : index
    %19 = vector.load %arg1[%c3, %c0_16, %c0_17] : memref<8x16x128xbf16, #tpu.memory_space<vmem>>, vector<1x16x128xbf16>
    %20 = vector.shape_cast %19 : vector<1x16x128xbf16> to vector<16x128xbf16>
    %cst_18 = arith.constant dense<0.000000e+00> : vector<48x128xf32>
    %21 = tpu.matmul %4, %20, %cst_18 {dimension_numbers = #tpu.dot_dimension_numbers<[1], [0], [0], [1], [0, 0, 1, 1], [], []>} : vector<48x16xbf16>, vector<16x128xbf16>, vector<48x128xf32> -> vector<48x128xf32>
    %22 = vector.extract_strided_slice %21 {offsets = [3, 0], sizes = [41, 128], strides = [1, 1]} : vector<48x128xf32> to vector<41x128xf32>
    %23 = arith.addf %18, %22 : vector<41x128xf32>
    %c4 = arith.constant 4 : index
    %c0_19 = arith.constant 0 : index
    %c0_20 = arith.constant 0 : index
    %24 = vector.load %arg1[%c4, %c0_19, %c0_20] : memref<8x16x128xbf16, #tpu.memory_space<vmem>>, vector<1x16x128xbf16>
    %25 = vector.shape_cast %24 : vector<1x16x128xbf16> to vector<16x128xbf16>
    %cst_21 = arith.constant dense<0.000000e+00> : vector<48x128xf32>
    %26 = tpu.matmul %4, %25, %cst_21 {dimension_numbers = #tpu.dot_dimension_numbers<[1], [0], [0], [1], [0, 0, 1, 1], [], []>} : vector<48x16xbf16>, vector<16x128xbf16>, vector<48x128xf32> -> vector<48x128xf32>
    %27 = vector.extract_strided_slice %26 {offsets = [4, 0], sizes = [41, 128], strides = [1, 1]} : vector<48x128xf32> to vector<41x128xf32>
    %28 = arith.addf %23, %27 : vector<41x128xf32>
    %c5 = arith.constant 5 : index
    %c0_22 = arith.constant 0 : index
    %c0_23 = arith.constant 0 : index
    %29 = vector.load %arg1[%c5, %c0_22, %c0_23] : memref<8x16x128xbf16, #tpu.memory_space<vmem>>, vector<1x16x128xbf16>
    %30 = vector.shape_cast %29 : vector<1x16x128xbf16> to vector<16x128xbf16>
    %cst_24 = arith.constant dense<0.000000e+00> : vector<48x128xf32>
    %31 = tpu.matmul %4, %30, %cst_24 {dimension_numbers = #tpu.dot_dimension_numbers<[1], [0], [0], [1], [0, 0, 1, 1], [], []>} : vector<48x16xbf16>, vector<16x128xbf16>, vector<48x128xf32> -> vector<48x128xf32>
    %32 = vector.extract_strided_slice %31 {offsets = [5, 0], sizes = [41, 128], strides = [1, 1]} : vector<48x128xf32> to vector<41x128xf32>
    %33 = arith.addf %28, %32 : vector<41x128xf32>
    %c6 = arith.constant 6 : index
    %c0_25 = arith.constant 0 : index
    %c0_26 = arith.constant 0 : index
    %34 = vector.load %arg1[%c6, %c0_25, %c0_26] : memref<8x16x128xbf16, #tpu.memory_space<vmem>>, vector<1x16x128xbf16>
    %35 = vector.shape_cast %34 : vector<1x16x128xbf16> to vector<16x128xbf16>
    %cst_27 = arith.constant dense<0.000000e+00> : vector<48x128xf32>
    %36 = tpu.matmul %4, %35, %cst_27 {dimension_numbers = #tpu.dot_dimension_numbers<[1], [0], [0], [1], [0, 0, 1, 1], [], []>} : vector<48x16xbf16>, vector<16x128xbf16>, vector<48x128xf32> -> vector<48x128xf32>
    %37 = vector.extract_strided_slice %36 {offsets = [6, 0], sizes = [41, 128], strides = [1, 1]} : vector<48x128xf32> to vector<41x128xf32>
    %38 = arith.addf %33, %37 : vector<41x128xf32>
    %c7 = arith.constant 7 : index
    %c0_28 = arith.constant 0 : index
    %c0_29 = arith.constant 0 : index
    %39 = vector.load %arg1[%c7, %c0_28, %c0_29] : memref<8x16x128xbf16, #tpu.memory_space<vmem>>, vector<1x16x128xbf16>
    %40 = vector.shape_cast %39 : vector<1x16x128xbf16> to vector<16x128xbf16>
    %cst_30 = arith.constant dense<0.000000e+00> : vector<48x128xf32>
    %41 = tpu.matmul %4, %40, %cst_30 {dimension_numbers = #tpu.dot_dimension_numbers<[1], [0], [0], [1], [0, 0, 1, 1], [], []>} : vector<48x16xbf16>, vector<16x128xbf16>, vector<48x128xf32> -> vector<48x128xf32>
    %42 = vector.extract_strided_slice %41 {offsets = [7, 0], sizes = [41, 128], strides = [1, 1]} : vector<48x128xf32> to vector<41x128xf32>
    %43 = arith.addf %38, %42 : vector<41x128xf32>
    %c0_31 = arith.constant 0 : index
    %c0_32 = arith.constant 0 : index
    %44 = vector.load %arg4[%c0_31, %c0_32] : memref<3x128xf32, #tpu.memory_space<vmem>>, vector<1x128xf32>
    %45 = vector.broadcast %44 : vector<1x128xf32> to vector<41x128xf32>
    %46 = arith.addf %43, %45 : vector<41x128xf32>
    %cst_33 = arith.constant 0.000000e+00 : f32
    %47 = vector.broadcast %cst_33 : f32 to vector<41x128xf32>
    %48 = arith.maximumf %46, %47 : vector<41x128xf32>
    %cst_34 = arith.constant 0.000000e+00 : f32
    %49 = vector.broadcast %cst_34 : f32 to vector<1x128xf32>
    %50 = vector.extract_strided_slice %48 {offsets = [0, 0], sizes = [17, 128], strides = [1, 1]} : vector<41x128xf32> to vector<17x128xf32>
    %51 = tpu.concatenate %49, %50 in 0 : vector<1x128xf32>, vector<17x128xf32> -> vector<18x128xf32>
    %c0_35 = arith.constant 0 : index
    %c0_36 = arith.constant 0 : index
    %52 = vector.load %arg13[%c0_35, %c0_36] : memref<48x128xf32, #tpu.memory_space<vmem>>, vector<18x128xf32>
    tpu.vector_store %arg13[%c0_35, %c0_36], %51 {strides = array<i32>} : memref<48x128xf32, #tpu.memory_space<vmem>>, vector<18x128xf32>,
    %53 = vector.extract_strided_slice %48 {offsets = [24, 0], sizes = [17, 128], strides = [1, 1]} : vector<41x128xf32> to vector<17x128xf32>
    %54 = tpu.concatenate %49, %53 in 0 : vector<1x128xf32>, vector<17x128xf32> -> vector<18x128xf32>
    %c24 = arith.constant 24 : index
    %c0_37 = arith.constant 0 : index
    %55 = vector.load %arg13[%c24, %c0_37] : memref<48x128xf32, #tpu.memory_space<vmem>>, vector<18x128xf32>
    tpu.vector_store %arg13[%c24, %c0_37], %54 {strides = array<i32>} : memref<48x128xf32, #tpu.memory_space<vmem>>, vector<18x128xf32>,
    %c0_38 = arith.constant 0 : index
    %c0_39 = arith.constant 0 : index
    %56 = tpu.strided_load %arg13[%c0_38, %c0_39] {strides = array<i32: 2, 1>} : memref<48x128xf32, #tpu.memory_space<vmem>>, vector<21x128xf32>
    %c1_40 = arith.constant 1 : index
    %c0_41 = arith.constant 0 : index
    %57 = tpu.strided_load %arg13[%c1_40, %c0_41] {strides = array<i32: 2, 1>} : memref<48x128xf32, #tpu.memory_space<vmem>>, vector<21x128xf32>
    %58 = arith.maximumf %56, %57 : vector<21x128xf32>
    %59 = vector.extract_strided_slice %58 {offsets = [0, 0], sizes = [9, 128], strides = [1, 1]} : vector<21x128xf32> to vector<9x128xf32>
    %c4_42 = arith.constant 4 : index
    %c0_43 = arith.constant 0 : index
    %60 = vector.load %arg11[%c4_42, %c0_43] : memref<48x128xf32, #tpu.memory_space<vmem>>, vector<9x128xf32>
    tpu.vector_store %arg11[%c4_42, %c0_43], %59 {strides = array<i32>} : memref<48x128xf32, #tpu.memory_space<vmem>>, vector<9x128xf32>,
    %61 = vector.extract_strided_slice %58 {offsets = [12, 0], sizes = [9, 128], strides = [1, 1]} : vector<21x128xf32> to vector<9x128xf32>
    %c28 = arith.constant 28 : index
    %c0_44 = arith.constant 0 : index
    %62 = vector.load %arg11[%c28, %c0_44] : memref<48x128xf32, #tpu.memory_space<vmem>>, vector<9x128xf32>
    tpu.vector_store %arg11[%c28, %c0_44], %61 {strides = array<i32>} : memref<48x128xf32, #tpu.memory_space<vmem>>, vector<9x128xf32>,
    %c0_45 = arith.constant 0 : index
    %c0_46 = arith.constant 0 : index
    %63 = vector.load %arg11[%c0_45, %c0_46] : memref<48x128xf32, #tpu.memory_space<vmem>>, vector<48x32xf32>
    %64 = arith.truncf %63 : vector<48x32xf32> to vector<48x32xbf16>
    %c0_47 = arith.constant 0 : index
    %c0_48 = arith.constant 0 : index
    %c0_49 = arith.constant 0 : index
    %65 = vector.load %arg2[%c0_47, %c0_48, %c0_49] : memref<8x32x128xbf16, #tpu.memory_space<vmem>>, vector<1x32x128xbf16>
    %66 = vector.shape_cast %65 : vector<1x32x128xbf16> to vector<32x128xbf16>
    %cst_50 = arith.constant dense<0.000000e+00> : vector<48x128xf32>
    %67 = tpu.matmul %64, %66, %cst_50 {dimension_numbers = #tpu.dot_dimension_numbers<[1], [0], [0], [1], [0, 0, 1, 1], [], []>} : vector<48x32xbf16>, vector<32x128xbf16>, vector<48x128xf32> -> vector<48x128xf32>
    %68 = vector.extract_strided_slice %67 {offsets = [0, 0], sizes = [34, 128], strides = [1, 1]} : vector<48x128xf32> to vector<34x128xf32>
    %c1_51 = arith.constant 1 : index
    %c0_52 = arith.constant 0 : index
    %c0_53 = arith.constant 0 : index
    %69 = vector.load %arg2[%c1_51, %c0_52, %c0_53] : memref<8x32x128xbf16, #tpu.memory_space<vmem>>, vector<1x32x128xbf16>
    %70 = vector.shape_cast %69 : vector<1x32x128xbf16> to vector<32x128xbf16>
    %cst_54 = arith.constant dense<0.000000e+00> : vector<48x128xf32>
    %71 = tpu.matmul %64, %70, %cst_54 {dimension_numbers = #tpu.dot_dimension_numbers<[1], [0], [0], [1], [0, 0, 1, 1], [], []>} : vector<48x32xbf16>, vector<32x128xbf16>, vector<48x128xf32> -> vector<48x128xf32>
    %72 = vector.extract_strided_slice %71 {offsets = [1, 0], sizes = [34, 128], strides = [1, 1]} : vector<48x128xf32> to vector<34x128xf32>
    %73 = arith.addf %68, %72 : vector<34x128xf32>
    %c2_55 = arith.constant 2 : index
    %c0_56 = arith.constant 0 : index
    %c0_57 = arith.constant 0 : index
    %74 = vector.load %arg2[%c2_55, %c0_56, %c0_57] : memref<8x32x128xbf16, #tpu.memory_space<vmem>>, vector<1x32x128xbf16>
    %75 = vector.shape_cast %74 : vector<1x32x128xbf16> to vector<32x128xbf16>
    %cst_58 = arith.constant dense<0.000000e+00> : vector<48x128xf32>
    %76 = tpu.matmul %64, %75, %cst_58 {dimension_numbers = #tpu.dot_dimension_numbers<[1], [0], [0], [1], [0, 0, 1, 1], [], []>} : vector<48x32xbf16>, vector<32x128xbf16>, vector<48x128xf32> -> vector<48x128xf32>
    %77 = vector.extract_strided_slice %76 {offsets = [2, 0], sizes = [34, 128], strides = [1, 1]} : vector<48x128xf32> to vector<34x128xf32>
    %78 = arith.addf %73, %77 : vector<34x128xf32>
    %c3_59 = arith.constant 3 : index
    %c0_60 = arith.constant 0 : index
    %c0_61 = arith.constant 0 : index
    %79 = vector.load %arg2[%c3_59, %c0_60, %c0_61] : memref<8x32x128xbf16, #tpu.memory_space<vmem>>, vector<1x32x128xbf16>
    %80 = vector.shape_cast %79 : vector<1x32x128xbf16> to vector<32x128xbf16>
    %cst_62 = arith.constant dense<0.000000e+00> : vector<48x128xf32>
    %81 = tpu.matmul %64, %80, %cst_62 {dimension_numbers = #tpu.dot_dimension_numbers<[1], [0], [0], [1], [0, 0, 1, 1], [], []>} : vector<48x32xbf16>, vector<32x128xbf16>, vector<48x128xf32> -> vector<48x128xf32>
    %82 = vector.extract_strided_slice %81 {offsets = [3, 0], sizes = [34, 128], strides = [1, 1]} : vector<48x128xf32> to vector<34x128xf32>
    %83 = arith.addf %78, %82 : vector<34x128xf32>
    %c4_63 = arith.constant 4 : index
    %c0_64 = arith.constant 0 : index
    %c0_65 = arith.constant 0 : index
    %84 = vector.load %arg2[%c4_63, %c0_64, %c0_65] : memref<8x32x128xbf16, #tpu.memory_space<vmem>>, vector<1x32x128xbf16>
    %85 = vector.shape_cast %84 : vector<1x32x128xbf16> to vector<32x128xbf16>
    %cst_66 = arith.constant dense<0.000000e+00> : vector<48x128xf32>
    %86 = tpu.matmul %64, %85, %cst_66 {dimension_numbers = #tpu.dot_dimension_numbers<[1], [0], [0], [1], [0, 0, 1, 1], [], []>} : vector<48x32xbf16>, vector<32x128xbf16>, vector<48x128xf32> -> vector<48x128xf32>
    %87 = vector.extract_strided_slice %86 {offsets = [4, 0], sizes = [34, 128], strides = [1, 1]} : vector<48x128xf32> to vector<34x128xf32>
    %88 = arith.addf %83, %87 : vector<34x128xf32>
    %c5_67 = arith.constant 5 : index
    %c0_68 = arith.constant 0 : index
    %c0_69 = arith.constant 0 : index
    %89 = vector.load %arg2[%c5_67, %c0_68, %c0_69] : memref<8x32x128xbf16, #tpu.memory_space<vmem>>, vector<1x32x128xbf16>
    %90 = vector.shape_cast %89 : vector<1x32x128xbf16> to vector<32x128xbf16>
    %cst_70 = arith.constant dense<0.000000e+00> : vector<48x128xf32>
    %91 = tpu.matmul %64, %90, %cst_70 {dimension_numbers = #tpu.dot_dimension_numbers<[1], [0], [0], [1], [0, 0, 1, 1], [], []>} : vector<48x32xbf16>, vector<32x128xbf16>, vector<48x128xf32> -> vector<48x128xf32>
    %92 = vector.extract_strided_slice %91 {offsets = [5, 0], sizes = [34, 128], strides = [1, 1]} : vector<48x128xf32> to vector<34x128xf32>
    %93 = arith.addf %88, %92 : vector<34x128xf32>
    %c6_71 = arith.constant 6 : index
    %c0_72 = arith.constant 0 : index
    %c0_73 = arith.constant 0 : index
    %94 = vector.load %arg2[%c6_71, %c0_72, %c0_73] : memref<8x32x128xbf16, #tpu.memory_space<vmem>>, vector<1x32x128xbf16>
    %95 = vector.shape_cast %94 : vector<1x32x128xbf16> to vector<32x128xbf16>
    %cst_74 = arith.constant dense<0.000000e+00> : vector<48x128xf32>
    %96 = tpu.matmul %64, %95, %cst_74 {dimension_numbers = #tpu.dot_dimension_numbers<[1], [0], [0], [1], [0, 0, 1, 1], [], []>} : vector<48x32xbf16>, vector<32x128xbf16>, vector<48x128xf32> -> vector<48x128xf32>
    %97 = vector.extract_strided_slice %96 {offsets = [6, 0], sizes = [34, 128], strides = [1, 1]} : vector<48x128xf32> to vector<34x128xf32>
    %98 = arith.addf %93, %97 : vector<34x128xf32>
    %c7_75 = arith.constant 7 : index
    %c0_76 = arith.constant 0 : index
    %c0_77 = arith.constant 0 : index
    %99 = vector.load %arg2[%c7_75, %c0_76, %c0_77] : memref<8x32x128xbf16, #tpu.memory_space<vmem>>, vector<1x32x128xbf16>
    %100 = vector.shape_cast %99 : vector<1x32x128xbf16> to vector<32x128xbf16>
    %cst_78 = arith.constant dense<0.000000e+00> : vector<48x128xf32>
    %101 = tpu.matmul %64, %100, %cst_78 {dimension_numbers = #tpu.dot_dimension_numbers<[1], [0], [0], [1], [0, 0, 1, 1], [], []>} : vector<48x32xbf16>, vector<32x128xbf16>, vector<48x128xf32> -> vector<48x128xf32>
    %102 = vector.extract_strided_slice %101 {offsets = [7, 0], sizes = [34, 128], strides = [1, 1]} : vector<48x128xf32> to vector<34x128xf32>
    %103 = arith.addf %98, %102 : vector<34x128xf32>
    %c1_79 = arith.constant 1 : index
    %c0_80 = arith.constant 0 : index
    %104 = vector.load %arg4[%c1_79, %c0_80] : memref<3x128xf32, #tpu.memory_space<vmem>>, vector<1x128xf32>
    %105 = vector.broadcast %104 : vector<1x128xf32> to vector<34x128xf32>
    %106 = arith.addf %103, %105 : vector<34x128xf32>
    %cst_81 = arith.constant 0.000000e+00 : f32
    %107 = vector.broadcast %cst_81 : f32 to vector<34x128xf32>
    %108 = arith.maximumf %106, %107 : vector<34x128xf32>
    %cst_82 = arith.constant 0.000000e+00 : f32
    %109 = vector.broadcast %cst_82 : f32 to vector<1x128xf32>
    %110 = vector.extract_strided_slice %108 {offsets = [0, 0], sizes = [10, 128], strides = [1, 1]} : vector<34x128xf32> to vector<10x128xf32>
    %cst_83 = arith.constant 0.000000e+00 : f32
    %111 = vector.broadcast %cst_83 : f32 to vector<1x128xf32>
    %112 = tpu.concatenate %109, %110, %111 in 0 : vector<1x128xf32>, vector<10x128xf32>, vector<1x128xf32> -> vector<12x128xf32>
    %c0_84 = arith.constant 0 : index
    %c0_85 = arith.constant 0 : index
    %113 = vector.load %arg13[%c0_84, %c0_85] : memref<48x128xf32, #tpu.memory_space<vmem>>, vector<12x128xf32>
    tpu.vector_store %arg13[%c0_84, %c0_85], %112 {strides = array<i32>} : memref<48x128xf32, #tpu.memory_space<vmem>>, vector<12x128xf32>,
    %114 = vector.extract_strided_slice %108 {offsets = [24, 0], sizes = [10, 128], strides = [1, 1]} : vector<34x128xf32> to vector<10x128xf32>
    %cst_86 = arith.constant 0.000000e+00 : f32
    %115 = vector.broadcast %cst_86 : f32 to vector<1x128xf32>
    %116 = tpu.concatenate %109, %114, %115 in 0 : vector<1x128xf32>, vector<10x128xf32>, vector<1x128xf32> -> vector<12x128xf32>
    %c24_87 = arith.constant 24 : index
    %c0_88 = arith.constant 0 : index
    %117 = vector.load %arg13[%c24_87, %c0_88] : memref<48x128xf32, #tpu.memory_space<vmem>>, vector<12x128xf32>
    tpu.vector_store %arg13[%c24_87, %c0_88], %116 {strides = array<i32>} : memref<48x128xf32, #tpu.memory_space<vmem>>, vector<12x128xf32>,
    %c0_89 = arith.constant 0 : index
    %c0_90 = arith.constant 0 : index
    %118 = tpu.strided_load %arg13[%c0_89, %c0_90] {strides = array<i32: 2, 1>} : memref<48x128xf32, #tpu.memory_space<vmem>>, vector<18x128xf32>
    %c1_91 = arith.constant 1 : index
    %c0_92 = arith.constant 0 : index
    %119 = tpu.strided_load %arg13[%c1_91, %c0_92] {strides = array<i32: 2, 1>} : memref<48x128xf32, #tpu.memory_space<vmem>>, vector<18x128xf32>
    %120 = arith.maximumf %118, %119 : vector<18x128xf32>
    %121 = vector.extract_strided_slice %120 {offsets = [0, 0], sizes = [6, 128], strides = [1, 1]} : vector<18x128xf32> to vector<6x128xf32>
    %c4_93 = arith.constant 4 : index
    %c0_94 = arith.constant 0 : index
    %122 = vector.load %arg12[%c4_93, %c0_94] : memref<48x128xf32, #tpu.memory_space<vmem>>, vector<6x128xf32>
    tpu.vector_store %arg12[%c4_93, %c0_94], %121 {strides = array<i32>} : memref<48x128xf32, #tpu.memory_space<vmem>>, vector<6x128xf32>,
    %123 = vector.extract_strided_slice %120 {offsets = [12, 0], sizes = [6, 128], strides = [1, 1]} : vector<18x128xf32> to vector<6x128xf32>
    %c28_95 = arith.constant 28 : index
    %c0_96 = arith.constant 0 : index
    %124 = vector.load %arg12[%c28_95, %c0_96] : memref<48x128xf32, #tpu.memory_space<vmem>>, vector<6x128xf32>
    tpu.vector_store %arg12[%c28_95, %c0_96], %123 {strides = array<i32>} : memref<48x128xf32, #tpu.memory_space<vmem>>, vector<6x128xf32>,
    %c0_97 = arith.constant 0 : index
    %c0_98 = arith.constant 0 : index
    %125 = vector.load %arg12[%c0_97, %c0_98] : memref<48x128xf32, #tpu.memory_space<vmem>>, vector<48x64xf32>
    %126 = arith.truncf %125 : vector<48x64xf32> to vector<48x64xbf16>
    %c0_99 = arith.constant 0 : index
    %c0_100 = arith.constant 0 : index
    %c0_101 = arith.constant 0 : index
    %127 = vector.load %arg3[%c0_99, %c0_100, %c0_101] : memref<8x64x128xbf16, #tpu.memory_space<vmem>>, vector<1x64x128xbf16>
    %128 = vector.shape_cast %127 : vector<1x64x128xbf16> to vector<64x128xbf16>
    %cst_102 = arith.constant dense<0.000000e+00> : vector<48x128xf32>
    %129 = tpu.matmul %126, %128, %cst_102 {dimension_numbers = #tpu.dot_dimension_numbers<[1], [0], [0], [1], [0, 0, 1, 1], [], []>} : vector<48x64xbf16>, vector<64x128xbf16>, vector<48x128xf32> -> vector<48x128xf32>
    %130 = vector.extract_strided_slice %129 {offsets = [0, 0], sizes = [31, 128], strides = [1, 1]} : vector<48x128xf32> to vector<31x128xf32>
    %c1_103 = arith.constant 1 : index
    %c0_104 = arith.constant 0 : index
    %c0_105 = arith.constant 0 : index
    %131 = vector.load %arg3[%c1_103, %c0_104, %c0_105] : memref<8x64x128xbf16, #tpu.memory_space<vmem>>, vector<1x64x128xbf16>
    %132 = vector.shape_cast %131 : vector<1x64x128xbf16> to vector<64x128xbf16>
    %cst_106 = arith.constant dense<0.000000e+00> : vector<48x128xf32>
    %133 = tpu.matmul %126, %132, %cst_106 {dimension_numbers = #tpu.dot_dimension_numbers<[1], [0], [0], [1], [0, 0, 1, 1], [], []>} : vector<48x64xbf16>, vector<64x128xbf16>, vector<48x128xf32> -> vector<48x128xf32>
    %134 = vector.extract_strided_slice %133 {offsets = [1, 0], sizes = [31, 128], strides = [1, 1]} : vector<48x128xf32> to vector<31x128xf32>
    %135 = arith.addf %130, %134 : vector<31x128xf32>
    %c2_107 = arith.constant 2 : index
    %c0_108 = arith.constant 0 : index
    %c0_109 = arith.constant 0 : index
    %136 = vector.load %arg3[%c2_107, %c0_108, %c0_109] : memref<8x64x128xbf16, #tpu.memory_space<vmem>>, vector<1x64x128xbf16>
    %137 = vector.shape_cast %136 : vector<1x64x128xbf16> to vector<64x128xbf16>
    %cst_110 = arith.constant dense<0.000000e+00> : vector<48x128xf32>
    %138 = tpu.matmul %126, %137, %cst_110 {dimension_numbers = #tpu.dot_dimension_numbers<[1], [0], [0], [1], [0, 0, 1, 1], [], []>} : vector<48x64xbf16>, vector<64x128xbf16>, vector<48x128xf32> -> vector<48x128xf32>
    %139 = vector.extract_strided_slice %138 {offsets = [2, 0], sizes = [31, 128], strides = [1, 1]} : vector<48x128xf32> to vector<31x128xf32>
    %140 = arith.addf %135, %139 : vector<31x128xf32>
    %c3_111 = arith.constant 3 : index
    %c0_112 = arith.constant 0 : index
    %c0_113 = arith.constant 0 : index
    %141 = vector.load %arg3[%c3_111, %c0_112, %c0_113] : memref<8x64x128xbf16, #tpu.memory_space<vmem>>, vector<1x64x128xbf16>
    %142 = vector.shape_cast %141 : vector<1x64x128xbf16> to vector<64x128xbf16>
    %cst_114 = arith.constant dense<0.000000e+00> : vector<48x128xf32>
    %143 = tpu.matmul %126, %142, %cst_114 {dimension_numbers = #tpu.dot_dimension_numbers<[1], [0], [0], [1], [0, 0, 1, 1], [], []>} : vector<48x64xbf16>, vector<64x128xbf16>, vector<48x128xf32> -> vector<48x128xf32>
    %144 = vector.extract_strided_slice %143 {offsets = [3, 0], sizes = [31, 128], strides = [1, 1]} : vector<48x128xf32> to vector<31x128xf32>
    %145 = arith.addf %140, %144 : vector<31x128xf32>
    %c4_115 = arith.constant 4 : index
    %c0_116 = arith.constant 0 : index
    %c0_117 = arith.constant 0 : index
    %146 = vector.load %arg3[%c4_115, %c0_116, %c0_117] : memref<8x64x128xbf16, #tpu.memory_space<vmem>>, vector<1x64x128xbf16>
    %147 = vector.shape_cast %146 : vector<1x64x128xbf16> to vector<64x128xbf16>
    %cst_118 = arith.constant dense<0.000000e+00> : vector<48x128xf32>
    %148 = tpu.matmul %126, %147, %cst_118 {dimension_numbers = #tpu.dot_dimension_numbers<[1], [0], [0], [1], [0, 0, 1, 1], [], []>} : vector<48x64xbf16>, vector<64x128xbf16>, vector<48x128xf32> -> vector<48x128xf32>
    %149 = vector.extract_strided_slice %148 {offsets = [4, 0], sizes = [31, 128], strides = [1, 1]} : vector<48x128xf32> to vector<31x128xf32>
    %150 = arith.addf %145, %149 : vector<31x128xf32>
    %c5_119 = arith.constant 5 : index
    %c0_120 = arith.constant 0 : index
    %c0_121 = arith.constant 0 : index
    %151 = vector.load %arg3[%c5_119, %c0_120, %c0_121] : memref<8x64x128xbf16, #tpu.memory_space<vmem>>, vector<1x64x128xbf16>
    %152 = vector.shape_cast %151 : vector<1x64x128xbf16> to vector<64x128xbf16>
    %cst_122 = arith.constant dense<0.000000e+00> : vector<48x128xf32>
    %153 = tpu.matmul %126, %152, %cst_122 {dimension_numbers = #tpu.dot_dimension_numbers<[1], [0], [0], [1], [0, 0, 1, 1], [], []>} : vector<48x64xbf16>, vector<64x128xbf16>, vector<48x128xf32> -> vector<48x128xf32>
    %154 = vector.extract_strided_slice %153 {offsets = [5, 0], sizes = [31, 128], strides = [1, 1]} : vector<48x128xf32> to vector<31x128xf32>
    %155 = arith.addf %150, %154 : vector<31x128xf32>
    %c6_123 = arith.constant 6 : index
    %c0_124 = arith.constant 0 : index
    %c0_125 = arith.constant 0 : index
    %156 = vector.load %arg3[%c6_123, %c0_124, %c0_125] : memref<8x64x128xbf16, #tpu.memory_space<vmem>>, vector<1x64x128xbf16>
    %157 = vector.shape_cast %156 : vector<1x64x128xbf16> to vector<64x128xbf16>
    %cst_126 = arith.constant dense<0.000000e+00> : vector<48x128xf32>
    %158 = tpu.matmul %126, %157, %cst_126 {dimension_numbers = #tpu.dot_dimension_numbers<[1], [0], [0], [1], [0, 0, 1, 1], [], []>} : vector<48x64xbf16>, vector<64x128xbf16>, vector<48x128xf32> -> vector<48x128xf32>
    %159 = vector.extract_strided_slice %158 {offsets = [6, 0], sizes = [31, 128], strides = [1, 1]} : vector<48x128xf32> to vector<31x128xf32>
    %160 = arith.addf %155, %159 : vector<31x128xf32>
    %c7_127 = arith.constant 7 : index
    %c0_128 = arith.constant 0 : index
    %c0_129 = arith.constant 0 : index
    %161 = vector.load %arg3[%c7_127, %c0_128, %c0_129] : memref<8x64x128xbf16, #tpu.memory_space<vmem>>, vector<1x64x128xbf16>
    %162 = vector.shape_cast %161 : vector<1x64x128xbf16> to vector<64x128xbf16>
    %cst_130 = arith.constant dense<0.000000e+00> : vector<48x128xf32>
    %163 = tpu.matmul %126, %162, %cst_130 {dimension_numbers = #tpu.dot_dimension_numbers<[1], [0], [0], [1], [0, 0, 1, 1], [], []>} : vector<48x64xbf16>, vector<64x128xbf16>, vector<48x128xf32> -> vector<48x128xf32>
    %164 = vector.extract_strided_slice %163 {offsets = [7, 0], sizes = [31, 128], strides = [1, 1]} : vector<48x128xf32> to vector<31x128xf32>
    %165 = arith.addf %160, %164 : vector<31x128xf32>
    %c2_131 = arith.constant 2 : index
    %c0_132 = arith.constant 0 : index
    %166 = vector.load %arg4[%c2_131, %c0_132] : memref<3x128xf32, #tpu.memory_space<vmem>>, vector<1x128xf32>
    %167 = vector.broadcast %166 : vector<1x128xf32> to vector<31x128xf32>
    %168 = arith.addf %165, %167 : vector<31x128xf32>
    %cst_133 = arith.constant 0.000000e+00 : f32
    %169 = vector.broadcast %cst_133 : f32 to vector<31x128xf32>
    %170 = arith.maximumf %168, %169 : vector<31x128xf32>
    %cst_134 = arith.constant 0.000000e+00 : f32
    %171 = vector.broadcast %cst_134 : f32 to vector<1x128xf32>
    %172 = vector.extract_strided_slice %170 {offsets = [0, 0], sizes = [7, 128], strides = [1, 1]} : vector<31x128xf32> to vector<7x128xf32>
    %173 = tpu.concatenate %171, %172 in 0 : vector<1x128xf32>, vector<7x128xf32> -> vector<8x128xf32>
    %c0_135 = arith.constant 0 : index
    %c0_136 = arith.constant 0 : index
    %174 = vector.load %arg13[%c0_135, %c0_136] : memref<48x128xf32, #tpu.memory_space<vmem>>, vector<8x128xf32>
    tpu.vector_store %arg13[%c0_135, %c0_136], %173 {strides = array<i32>} : memref<48x128xf32, #tpu.memory_space<vmem>>, vector<8x128xf32>,
    %175 = vector.extract_strided_slice %170 {offsets = [24, 0], sizes = [7, 128], strides = [1, 1]} : vector<31x128xf32> to vector<7x128xf32>
    %176 = tpu.concatenate %171, %175 in 0 : vector<1x128xf32>, vector<7x128xf32> -> vector<8x128xf32>
    %c24_137 = arith.constant 24 : index
    %c0_138 = arith.constant 0 : index
    %177 = vector.load %arg13[%c24_137, %c0_138] : memref<48x128xf32, #tpu.memory_space<vmem>>, vector<8x128xf32>
    tpu.vector_store %arg13[%c24_137, %c0_138], %176 {strides = array<i32>} : memref<48x128xf32, #tpu.memory_space<vmem>>, vector<8x128xf32>,
    %c0_139 = arith.constant 0 : index
    %c0_140 = arith.constant 0 : index
    %178 = tpu.strided_load %arg13[%c0_139, %c0_140] {strides = array<i32: 2, 1>} : memref<48x128xf32, #tpu.memory_space<vmem>>, vector<16x128xf32>
    %c1_141 = arith.constant 1 : index
    %c0_142 = arith.constant 0 : index
    %179 = tpu.strided_load %arg13[%c1_141, %c0_142] {strides = array<i32: 2, 1>} : memref<48x128xf32, #tpu.memory_space<vmem>>, vector<16x128xf32>
    %180 = arith.maximumf %178, %179 : vector<16x128xf32>
    %181 = vector.extract_strided_slice %180 {offsets = [0, 0], sizes = [4, 128], strides = [1, 1]} : vector<16x128xf32> to vector<4x128xf32>
    %c0_143 = arith.constant 0 : index
    %c0_144 = arith.constant 0 : index
    %182 = vector.load %arg9[%c0_143, %c0_144] : memref<8x128xf32, #tpu.memory_space<vmem>>, vector<4x128xf32>
    tpu.vector_store %arg9[%c0_143, %c0_144], %181 {strides = array<i32>} : memref<8x128xf32, #tpu.memory_space<vmem>>, vector<4x128xf32>,
    %183 = vector.extract_strided_slice %180 {offsets = [12, 0], sizes = [4, 128], strides = [1, 1]} : vector<16x128xf32> to vector<4x128xf32>
    %c4_145 = arith.constant 4 : index
    %c0_146 = arith.constant 0 : index
    %184 = vector.load %arg9[%c4_145, %c0_146] : memref<8x128xf32, #tpu.memory_space<vmem>>, vector<4x128xf32>
    tpu.vector_store %arg9[%c4_145, %c0_146], %183 {strides = array<i32>} : memref<8x128xf32, #tpu.memory_space<vmem>>, vector<4x128xf32>,
    %185 = vector.extract_strided_slice %180 {offsets = [0, 0], sizes = [1, 16], strides = [1, 1]} : vector<16x128xf32> to vector<1x16xf32>
    %186 = vector.extract_strided_slice %180 {offsets = [1, 0], sizes = [1, 16], strides = [1, 1]} : vector<16x128xf32> to vector<1x16xf32>
    %187 = vector.extract_strided_slice %180 {offsets = [2, 0], sizes = [1, 16], strides = [1, 1]} : vector<16x128xf32> to vector<1x16xf32>
    %188 = vector.extract_strided_slice %180 {offsets = [3, 0], sizes = [1, 16], strides = [1, 1]} : vector<16x128xf32> to vector<1x16xf32>
    %189 = tpu.concatenate %185, %186, %187, %188 in 1 : vector<1x16xf32>, vector<1x16xf32>, vector<1x16xf32>, vector<1x16xf32> -> vector<1x64xf32>
    %190 = vector.extract_strided_slice %180 {offsets = [12, 0], sizes = [1, 16], strides = [1, 1]} : vector<16x128xf32> to vector<1x16xf32>
    %191 = vector.extract_strided_slice %180 {offsets = [13, 0], sizes = [1, 16], strides = [1, 1]} : vector<16x128xf32> to vector<1x16xf32>
    %192 = vector.extract_strided_slice %180 {offsets = [14, 0], sizes = [1, 16], strides = [1, 1]} : vector<16x128xf32> to vector<1x16xf32>
    %193 = vector.extract_strided_slice %180 {offsets = [15, 0], sizes = [1, 16], strides = [1, 1]} : vector<16x128xf32> to vector<1x16xf32>
    %194 = tpu.concatenate %190, %191, %192, %193 in 1 : vector<1x16xf32>, vector<1x16xf32>, vector<1x16xf32>, vector<1x16xf32> -> vector<1x64xf32>
    %195 = tpu.concatenate %189, %194 in 0 : vector<1x64xf32>, vector<1x64xf32> -> vector<2x64xf32>
    %196 = arith.truncf %195 : vector<2x64xf32> to vector<2x64xbf16>
    %c0_147 = arith.constant 0 : index
    %c0_148 = arith.constant 0 : index
    %197 = vector.load %arg5[%c0_147, %c0_148] : memref<64x256xbf16, #tpu.memory_space<vmem>>, vector<64x256xbf16>
    %cst_149 = arith.constant dense<0.000000e+00> : vector<2x256xf32>
    %198 = tpu.matmul %196, %197, %cst_149 {dimension_numbers = #tpu.dot_dimension_numbers<[1], [0], [0], [1], [0, 0, 1, 1], [], []>} : vector<2x64xbf16>, vector<64x256xbf16>, vector<2x256xf32> -> vector<2x256xf32>
    %c0_150 = arith.constant 0 : index
    %c0_151 = arith.constant 0 : index
    %199 = vector.load %arg6[%c0_150, %c0_151] : memref<1x256xf32, #tpu.memory_space<vmem>>, vector<1x256xf32>
    %200 = vector.broadcast %199 : vector<1x256xf32> to vector<2x256xf32>
    %201 = arith.addf %198, %200 : vector<2x256xf32>
    %cst_152 = arith.constant 0.000000e+00 : f32
    %202 = vector.broadcast %cst_152 : f32 to vector<2x256xf32>
    %203 = arith.maximumf %201, %202 : vector<2x256xf32>
    %204 = arith.truncf %203 : vector<2x256xf32> to vector<2x256xbf16>
    %c0_153 = arith.constant 0 : index
    %c0_154 = arith.constant 0 : index
    %205 = vector.load %arg7[%c0_153, %c0_154] : memref<256x128xbf16, #tpu.memory_space<vmem>>, vector<256x128xbf16>
    %cst_155 = arith.constant dense<0.000000e+00> : vector<2x128xf32>
    %206 = tpu.matmul %204, %205, %cst_155 {dimension_numbers = #tpu.dot_dimension_numbers<[1], [0], [0], [1], [0, 0, 1, 1], [], []>} : vector<2x256xbf16>, vector<256x128xbf16>, vector<2x128xf32> -> vector<2x128xf32>
    %c0_156 = arith.constant 0 : index
    %c0_157 = arith.constant 0 : index
    %207 = vector.load %arg8[%c0_156, %c0_157] : memref<1x128xf32, #tpu.memory_space<vmem>>, vector<1x128xf32>
    %208 = vector.broadcast %207 : vector<1x128xf32> to vector<2x128xf32>
    %209 = arith.addf %206, %208 : vector<2x128xf32>
    %c0_158 = arith.constant 0 : index
    %c0_159 = arith.constant 0 : index
    %210 = vector.load %arg10[%c0_158, %c0_159] : memref<2x128xf32, #tpu.memory_space<vmem>>, vector<2x128xf32>
    tpu.vector_store %arg10[%c0_158, %c0_159], %209 {strides = array<i32>} : memref<2x128xf32, #tpu.memory_space<vmem>>, vector<2x128xf32>,
    return
  }
}

</mosaic_0001>

<llo_original>
// kernel: tfc_forward.1
$region0: #{tfc_forward.1}
  #allocation0 [shape = 'u32[]', space=smem, size = 0x4, offset = 0x4, fixed_abs, tag = 'smem constant byte address 0x4 - core index']
  #allocation1 [shape = 'u32[72,128]{1,0:T(1,128)}', space=vmem, size = 0x9000, scoped, tag = 'internal scratch']
  #allocation2 [shape = 'f32[48,128]{1,0:T(8,128)}', space=vmem, size = 0x6000, scoped, tag = 'scratch operand']
  #allocation3 [shape = 'f32[48,128]{1,0:T(8,128)}', space=vmem, size = 0x6000, scoped, tag = 'scratch operand']
  #allocation4 [shape = 'f32[48,128]{1,0:T(8,128)}', space=vmem, size = 0x6000, scoped, tag = 'scratch operand']
  %s0 = inlined_call_operand.vmem [shape: bf16[48,16], index: 0, kind: input, shape index: {}]
  %s1 = inlined_call_operand.vmem [shape: bf16[8,16,128], index: 1, kind: input, shape index: {}]
  %s2 = inlined_call_operand.hbm [shape: bf16[8,32,128], index: 2, kind: input, shape index: {}]
  %s3 = inlined_call_operand.hbm [shape: bf16[8,64,128], index: 3, kind: input, shape index: {}]
  %s4 = inlined_call_operand.vmem [shape: f32[3,128], index: 4, kind: input, shape index: {}]
  %s5 = inlined_call_operand.hbm [shape: bf16[64,256], index: 5, kind: input, shape index: {}]
  %s6 = inlined_call_operand.vmem [shape: f32[1,256], index: 6, kind: input, shape index: {}]
  %s7 = inlined_call_operand.hbm [shape: bf16[256,128], index: 7, kind: input, shape index: {}]
  %s8 = inlined_call_operand.vmem [shape: f32[1,128], index: 8, kind: input, shape index: {}]
  %s9 = inlined_call_operand.vmem [shape: f32[8,128], index: 9, kind: output, shape index: {0}]
  %s10 = inlined_call_operand.hbm [shape: f32[2,128], index: 10, kind: output, shape index: {1}]
  %11 = xla_tuple %s9, %s10
  %s12 = sld [smem:[#allocation0]]
  $region70: #{tfc_forward.1} parent=0
    _
  %s14 = ssub.s32 1, %s12
  %s15 = scalar_select 0, %s14, %s12
  $region1: #{tfc_forward.1} parent=0
    #allocation5 [shape = 'u8[65536]{0}', space=vmem, size = 0x10000, scoped, tag = 'input window, operand 2, single buffered']
    #allocation6 [shape = 's32[1]{0}', space=sflag, size = 0x4, scoped, tag = 'scoped memory for tfc_forward.1']
    #allocation7 [shape = 's32[1]{0}', space=sflag, size = 0x4, scoped, tag = 'scoped memory for tfc_forward.1']
    #allocation8 [shape = 'u8[131072]{0}', space=vmem, size = 0x20000, scoped, tag = 'input window, operand 3, single buffered']
    #allocation9 [shape = 's32[1]{0}', space=sflag, size = 0x4, scoped, tag = 'scoped memory for tfc_forward.1']
    #allocation10 [shape = 'u8[32768]{0}', space=vmem, size = 0x8000, scoped, tag = 'input window, operand 5, single buffered']
    #allocation11 [shape = 'u8[65536]{0}', space=vmem, size = 0x10000, scoped, tag = 'input window, operand 7, single buffered']
    #allocation12 [shape = 's32[1]{0}', space=sflag, size = 0x4, scoped, tag = 'scoped memory for tfc_forward.1']
    #allocation13 [shape = 'u8[1024]{0}', space=vmem, size = 0x400, scoped, tag = 'output window, operand 1, single buffered']
    %16 = vsyncpa [#allocation6], 0
    %17 = vsyncpa [#allocation9], 0
    %18 = vsyncpa [#allocation12], 0
    %19 = vsyncpa [#allocation7], 0
    // Predicated region
    $region2: #{tfc_forward.1} parent=1 // pred_check
      _
    $region3: #{tfc_forward.1} parent=1 // pred_check_branch
      %21 = sbr.rel (0) target = $region5
    $region4: #{tfc_forward.1} parent=1 // pred_region
      _
    $region5: #{tfc_forward.1} parent=1 // pred_fallthru
      _
    // Predicated region
    $region6: #{tfc_forward.1} parent=1 // pred_check
      _
    $region7: #{tfc_forward.1} parent=1 // pred_check_branch
      %23 = sbr.rel (0) target = $region9
    $region8: #{tfc_forward.1} parent=1 // pred_region
      _
    $region9: #{tfc_forward.1} parent=1 // pred_fallthru
      _
    // Predicated region
    $region10: #{tfc_forward.1} parent=1 // pred_check
      _
    $region11: #{tfc_forward.1} parent=1 // pred_check_branch
      %25 = sbr.rel (0) target = $region13
    $region12: #{tfc_forward.1} parent=1 // pred_region
      %27 = vsyncadd [#allocation6], 0
      %s28 = sshll.u32 %s2, 4
      %s29 = int_to_ptr.hbm [resolvable:$true] %s28
      %s30 = sshll.u32 [#allocation5], 4
      %s31 = int_to_ptr.vmem [resolvable:$true] %s30
      %36 = dma.hbm_to_vmem [thread:$0]  %s29, 2048, %s31, [#allocation6], 64, 64, 4
    $region13: #{tfc_forward.1} parent=1 // pred_fallthru
      _
    // Predicated region
    $region14: #{tfc_forward.1} parent=1 // pred_check
      _
    $region15: #{tfc_forward.1} parent=1 // pred_check_branch
      %38 = sbr.rel (0) target = $region17
    $region16: #{tfc_forward.1} parent=1 // pred_region
      %40 = vsyncadd [#allocation9], 0
      %s41 = sshll.u32 %s3, 4
      %s42 = int_to_ptr.hbm [resolvable:$true] %s41
      %s43 = sshll.u32 [#allocation8], 4
      %s44 = int_to_ptr.vmem [resolvable:$true] %s43
      %49 = dma.hbm_to_vmem [thread:$0]  %s42, 4096, %s44, [#allocation9], 64, 64, 4
    $region17: #{tfc_forward.1} parent=1 // pred_fallthru
      _
    // Predicated region
    $region18: #{tfc_forward.1} parent=1 // pred_check
      _
    $region19: #{tfc_forward.1} parent=1 // pred_check_branch
      %51 = sbr.rel (0) target = $region21
    $region20: #{tfc_forward.1} parent=1 // pred_region
      _
    $region21: #{tfc_forward.1} parent=1 // pred_fallthru
      _
    // Predicated region
    $region22: #{tfc_forward.1} parent=1 // pred_check
      _
    $region23: #{tfc_forward.1} parent=1 // pred_check_branch
      %53 = sbr.rel (0) target = $region25
    $region24: #{tfc_forward.1} parent=1 // pred_region
      %55 = vsyncadd [#allocation9], 0
      %s56 = sshll.u32 %s5, 4
      %s57 = int_to_ptr.hbm [resolvable:$true] %s56
      %s58 = sshll.u32 [#allocation10], 4
      %s59 = int_to_ptr.vmem [resolvable:$true] %s58
      %64 = dma.hbm_to_vmem [thread:$0]  %s57, 1024, %s59, [#allocation9], 128, 128, 8
    $region25: #{tfc_forward.1} parent=1 // pred_fallthru
      _
    // Predicated region
    $region26: #{tfc_forward.1} parent=1 // pred_check
      _
    $region27: #{tfc_forward.1} parent=1 // pred_check_branch
      %66 = sbr.rel (0) target = $region29
    $region28: #{tfc_forward.1} parent=1 // pred_region
      _
    $region29: #{tfc_forward.1} parent=1 // pred_fallthru
      _
    // Predicated region
    $region30: #{tfc_forward.1} parent=1 // pred_check
      _
    $region31: #{tfc_forward.1} parent=1 // pred_check_branch
      %68 = sbr.rel (0) target = $region33
    $region32: #{tfc_forward.1} parent=1 // pred_region
      %70 = vsyncadd [#allocation12], 0
      %s71 = sshll.u32 %s7, 4
      %s72 = int_to_ptr.hbm [resolvable:$true] %s71
      %s73 = sshll.u32 [#allocation11], 4
      %s74 = int_to_ptr.vmem [resolvable:$true] %s73
      %79 = dma.hbm_to_vmem [thread:$0]  %s72, 2048, %s74, [#allocation12], 64, 64, 4
    $region33: #{tfc_forward.1} parent=1 // pred_fallthru
      _
    // Predicated region
    $region34: #{tfc_forward.1} parent=1 // pred_check
      _
    $region35: #{tfc_forward.1} parent=1 // pred_check_branch
      %81 = sbr.rel (0) target = $region37
    $region36: #{tfc_forward.1} parent=1 // pred_region
      _
    $region37: #{tfc_forward.1} parent=1 // pred_fallthru
      _
    // Predicated region
    $region38: #{tfc_forward.1} parent=1 // pred_check
      _
    $region39: #{tfc_forward.1} parent=1 // pred_check_branch
      %83 = sbr.rel (0) target = $region41
    $region40: #{tfc_forward.1} parent=1 // pred_region
      %85 = dma.done [#allocation6], 2048
    $region41: #{tfc_forward.1} parent=1 // pred_fallthru
      _
    // Predicated region
    $region42: #{tfc_forward.1} parent=1 // pred_check
      _
    $region43: #{tfc_forward.1} parent=1 // pred_check_branch
      %87 = sbr.rel (0) target = $region45
    $region44: #{tfc_forward.1} parent=1 // pred_region
      %89 = dma.done [#allocation9], 4096
    $region45: #{tfc_forward.1} parent=1 // pred_fallthru
      _
    // Predicated region
    $region46: #{tfc_forward.1} parent=1 // pred_check
      _
    $region47: #{tfc_forward.1} parent=1 // pred_check_branch
      %91 = sbr.rel (0) target = $region49
    $region48: #{tfc_forward.1} parent=1 // pred_region
      %93 = dma.done [#allocation9], 1024
    $region49: #{tfc_forward.1} parent=1 // pred_fallthru
      _
    // Predicated region
    $region50: #{tfc_forward.1} parent=1 // pred_check
      _
    $region51: #{tfc_forward.1} parent=1 // pred_check_branch
      %95 = sbr.rel (0) target = $region53
    $region52: #{tfc_forward.1} parent=1 // pred_region
      %97 = dma.done [#allocation12], 2048
    $region53: #{tfc_forward.1} parent=1 // pred_fallthru
      _
    %99 = vst [vmem:[#allocation2] sm:$0xff] 0.0
    %100 = vst [vmem:[#allocation2 + $0x8] sm:$0xff] 0.0
    %101 = vst [vmem:[#allocation2 + $0x10] sm:$0xff] 0.0
    %102 = vst [vmem:[#allocation2 + $0x18] sm:$0xff] 0.0
    %103 = vst [vmem:[#allocation2 + $0x20] sm:$0xff] 0.0
    %104 = vst [vmem:[#allocation2 + $0x28] sm:$0xff] 0.0
    %105 = vst [vmem:[#allocation3] sm:$0xff] 0.0
    %106 = vst [vmem:[#allocation3 + $0x8] sm:$0xff] 0.0
    %107 = vst [vmem:[#allocation3 + $0x10] sm:$0xff] 0.0
    %108 = vst [vmem:[#allocation3 + $0x18] sm:$0xff] 0.0
    %109 = vst [vmem:[#allocation3 + $0x20] sm:$0xff] 0.0
    %110 = vst [vmem:[#allocation3 + $0x28] sm:$0xff] 0.0
    %v111 = vld [vmem:[%s0] sm:$0xf]
    %v112 = vld [vmem:[%s0 + $0x4] sm:$0xf]
    %v113 = vld [vmem:[%s0 + $0x8] sm:$0xf]
    %v114 = vld [vmem:[%s0 + $0xc] sm:$0xf]
    %v115 = vld [vmem:[%s0 + $0x10] sm:$0xf]
    %v116 = vld [vmem:[%s0 + $0x14] sm:$0xf]
    %v117 = vld [vmem:[%s1] sm:$0xf]
    %v118 = vld [vmem:[%s1 + $0x4] sm:$0xf]
    %v125 = vunpack.c.l.b16 %v111
    %v126 = vunpack.c.l.b16 %v112
    %v127 = vunpack.c.l.b16 %v113
    %v128 = vunpack.c.l.b16 %v114
    %v129 = vunpack.c.l.b16 %v115
    %v130 = vunpack.c.l.b16 %v116
    %v131 = vpack.c.b16 %v126, %v125
    %v132 = vpack.c.b16 %v128, %v127
    %v133 = vpack.c.b16 %v130, %v129
    %v136 = vunpack.c.l.b16 %v117
    %v137 = vunpack.c.l.b16 %v118
    %v138 = vpack.c.b16 %v137, %v136
    %vm140 = vcmask 130048
    %v142 = vsel %vm140, %v131, 0
    %v145 = vsel %vm140, %v132, 0
    %v148 = vsel %vm140, %v133, 0
    %150 = vmatpush.bf16.msra.mxu0 0
    %151 = vmatpush.bf16.msra.mxu0 0
    %152 = vmatpush.bf16.msra.mxu0 0
    %153 = vmatpush.bf16.msra.mxu0 0
    %154 = vmatpush.bf16.msra.mxu0 0
    %155 = vmatpush.bf16.msra.mxu0 0
    %156 = vmatpush.bf16.msra.mxu0 0
    %157 = vmatpush.bf16.msra.mxu0 %v138
    %158 = vmatmul.bf16.gmra.mxu0 %v142
    %v159 = vpop.f32.mrf.mxu0
    %v160 = vadd.f32 0.0, %v159
    %v161 = vpop.f32.mrf.mxu0
    %v162 = vadd.f32 0.0, %v161
    %163 = vmatmul.bf16.gmra.mxu0 %v145
    %v164 = vpop.f32.mrf.mxu0
    %v165 = vadd.f32 0.0, %v164
    %v166 = vpop.f32.mrf.mxu0
    %v167 = vadd.f32 0.0, %v166
    %168 = vmatmul.bf16.gmra.mxu0 %v148
    %v169 = vpop.f32.mrf.mxu0
    %v170 = vadd.f32 0.0, %v169
    %v171 = vpop.f32.mrf.mxu0
    %v172 = vadd.f32 0.0, %v171
    %173 = vdwg.mxu0
    %s174 = scalar_lea.vmem %s1, 8
    %v175 = vld [vmem:[%s174] sm:$0xf]
    %v176 = vld [vmem:[%s174 + $0x4] sm:$0xf]
    %v179 = vunpack.c.l.b16 %v175
    %v180 = vunpack.c.l.b16 %v176
    %v181 = vpack.c.b16 %v180, %v179
    %183 = vmatpush.bf16.msra.mxu0 0
    %184 = vmatpush.bf16.msra.mxu0 0
    %185 = vmatpush.bf16.msra.mxu0 0
    %186 = vmatpush.bf16.msra.mxu0 0
    %187 = vmatpush.bf16.msra.mxu0 0
    %188 = vmatpush.bf16.msra.mxu0 0
    %189 = vmatpush.bf16.msra.mxu0 0
    %190 = vmatpush.bf16.msra.mxu0 %v181
    %191 = vmatmul.bf16.gmra.mxu0 %v142
    %v192 = vpop.f32.mrf.mxu0
    %v193 = vadd.f32 0.0, %v192
    %v194 = vpop.f32.mrf.mxu0
    %v195 = vadd.f32 0.0, %v194
    %196 = vmatmul.bf16.gmra.mxu0 %v145
    %v197 = vpop.f32.mrf.mxu0
    %v198 = vadd.f32 0.0, %v197
    %v199 = vpop.f32.mrf.mxu0
    %v200 = vadd.f32 0.0, %v199
    %201 = vmatmul.bf16.gmra.mxu0 %v148
    %v202 = vpop.f32.mrf.mxu0
    %v203 = vadd.f32 0.0, %v202
    %v204 = vpop.f32.mrf.mxu0
    %v205 = vadd.f32 0.0, %v204
    %206 = vdwg.mxu0
    %vm213 = vcmask 1046528
    %v214 = vrot.slane %v193, 1
    %v215 = vrot.slane %v195, 1
    %v216 = vsel %vm213, %v214, %v215
    %v217 = vrot.slane %v198, 1
    %v218 = vsel %vm213, %v215, %v217
    %v219 = vrot.slane %v200, 1
    %v220 = vsel %vm213, %v217, %v219
    %v221 = vrot.slane %v203, 1
    %v222 = vsel %vm213, %v219, %v221
    %v223 = vrot.slane %v205, 1
    %v224 = vsel %vm213, %v221, %v223
    %v231 = vadd.f32 %v160, %v216
    %v232 = vadd.f32 %v162, %v218
    %v233 = vadd.f32 %v165, %v220
    %v234 = vadd.f32 %v167, %v222
    %v235 = vadd.f32 %v170, %v224
    %v236 = vadd.f32 %v172, %v223
    %s237 = scalar_lea.vmem %s1, 16
    %v238 = vld [vmem:[%s237] sm:$0xf]
    %v239 = vld [vmem:[%s237 + $0x4] sm:$0xf]
    %v242 = vunpack.c.l.b16 %v238
    %v243 = vunpack.c.l.b16 %v239
    %v244 = vpack.c.b16 %v243, %v242
    %246 = vmatpush.bf16.msra.mxu0 0
    %247 = vmatpush.bf16.msra.mxu0 0
    %248 = vmatpush.bf16.msra.mxu0 0
    %249 = vmatpush.bf16.msra.mxu0 0
    %250 = vmatpush.bf16.msra.mxu0 0
    %251 = vmatpush.bf16.msra.mxu0 0
    %252 = vmatpush.bf16.msra.mxu0 0
    %253 = vmatpush.bf16.msra.mxu0 %v244
    %254 = vmatmul.bf16.gmra.mxu0 %v142
    %v255 = vpop.f32.mrf.mxu0
    %v256 = vadd.f32 0.0, %v255
    %v257 = vpop.f32.mrf.mxu0
    %v258 = vadd.f32 0.0, %v257
    %259 = vmatmul.bf16.gmra.mxu0 %v145
    %v260 = vpop.f32.mrf.mxu0
    %v261 = vadd.f32 0.0, %v260
    %v262 = vpop.f32.mrf.mxu0
    %v263 = vadd.f32 0.0, %v262
    %264 = vmatmul.bf16.gmra.mxu0 %v148
    %v265 = vpop.f32.mrf.mxu0
    %v266 = vadd.f32 0.0, %v265
    %v267 = vpop.f32.mrf.mxu0
    %v268 = vadd.f32 0.0, %v267
    %269 = vdwg.mxu0
    %vm276 = vcmask 1045504
    %v277 = vrot.slane %v256, 2
    %v278 = vrot.slane %v258, 2
    %v279 = vsel %vm276, %v277, %v278
    %v280 = vrot.slane %v261, 2
    %v281 = vsel %vm276, %v278, %v280
    %v282 = vrot.slane %v263, 2
    %v283 = vsel %vm276, %v280, %v282
    %v284 = vrot.slane %v266, 2
    %v285 = vsel %vm276, %v282, %v284
    %v286 = vrot.slane %v268, 2
    %v287 = vsel %vm276, %v284, %v286
    %v294 = vadd.f32 %v231, %v279
    %v295 = vadd.f32 %v232, %v281
    %v296 = vadd.f32 %v233, %v283
    %v297 = vadd.f32 %v234, %v285
    %v298 = vadd.f32 %v235, %v287
    %v299 = vadd.f32 %v236, %v286
    %s300 = scalar_lea.vmem %s1, 24
    %v301 = vld [vmem:[%s300] sm:$0xf]
    %v302 = vld [vmem:[%s300 + $0x4] sm:$0xf]
    %v305 = vunpack.c.l.b16 %v301
    %v306 = vunpack.c.l.b16 %v302
    %v307 = vpack.c.b16 %v306, %v305
    %309 = vmatpush.bf16.msra.mxu0 0
    %310 = vmatpush.bf16.msra.mxu0 0
    %311 = vmatpush.bf16.msra.mxu0 0
    %312 = vmatpush.bf16.msra.mxu0 0
    %313 = vmatpush.bf16.msra.mxu0 0
    %314 = vmatpush.bf16.msra.mxu0 0
    %315 = vmatpush.bf16.msra.mxu0 0
    %316 = vmatpush.bf16.msra.mxu0 %v307
    %317 = vmatmul.bf16.gmra.mxu0 %v142
    %v318 = vpop.f32.mrf.mxu0
    %v319 = vadd.f32 0.0, %v318
    %v320 = vpop.f32.mrf.mxu0
    %v321 = vadd.f32 0.0, %v320
    %322 = vmatmul.bf16.gmra.mxu0 %v145
    %v323 = vpop.f32.mrf.mxu0
    %v324 = vadd.f32 0.0, %v323
    %v325 = vpop.f32.mrf.mxu0
    %v326 = vadd.f32 0.0, %v325
    %327 = vmatmul.bf16.gmra.mxu0 %v148
    %v328 = vpop.f32.mrf.mxu0
    %v329 = vadd.f32 0.0, %v328
    %v330 = vpop.f32.mrf.mxu0
    %v331 = vadd.f32 0.0, %v330
    %332 = vdwg.mxu0
    %vm339 = vcmask 1044480
    %v340 = vrot.slane %v319, 3
    %v341 = vrot.slane %v321, 3
    %v342 = vsel %vm339, %v340, %v341
    %v343 = vrot.slane %v324, 3
    %v344 = vsel %vm339, %v341, %v343
    %v345 = vrot.slane %v326, 3
    %v346 = vsel %vm339, %v343, %v345
    %v347 = vrot.slane %v329, 3
    %v348 = vsel %vm339, %v345, %v347
    %v349 = vrot.slane %v331, 3
    %v350 = vsel %vm339, %v347, %v349
    %v357 = vadd.f32 %v294, %v342
    %v358 = vadd.f32 %v295, %v344
    %v359 = vadd.f32 %v296, %v346
    %v360 = vadd.f32 %v297, %v348
    %v361 = vadd.f32 %v298, %v350
    %v362 = vadd.f32 %v299, %v349
    %s363 = scalar_lea.vmem %s1, 32
    %v364 = vld [vmem:[%s363] sm:$0xf]
    %v365 = vld [vmem:[%s363 + $0x4] sm:$0xf]
    %v368 = vunpack.c.l.b16 %v364
    %v369 = vunpack.c.l.b16 %v365
    %v370 = vpack.c.b16 %v369, %v368
    %372 = vmatpush.bf16.msra.mxu0 0
    %373 = vmatpush.bf16.msra.mxu0 0
    %374 = vmatpush.bf16.msra.mxu0 0
    %375 = vmatpush.bf16.msra.mxu0 0
    %376 = vmatpush.bf16.msra.mxu0 0
    %377 = vmatpush.bf16.msra.mxu0 0
    %378 = vmatpush.bf16.msra.mxu0 0
    %379 = vmatpush.bf16.msra.mxu0 %v370
    %380 = vmatmul.bf16.gmra.mxu0 %v142
    %v381 = vpop.f32.mrf.mxu0
    %v382 = vadd.f32 0.0, %v381
    %v383 = vpop.f32.mrf.mxu0
    %v384 = vadd.f32 0.0, %v383
    %385 = vmatmul.bf16.gmra.mxu0 %v145
    %v386 = vpop.f32.mrf.mxu0
    %v387 = vadd.f32 0.0, %v386
    %v388 = vpop.f32.mrf.mxu0
    %v389 = vadd.f32 0.0, %v388
    %390 = vmatmul.bf16.gmra.mxu0 %v148
    %v391 = vpop.f32.mrf.mxu0
    %v392 = vadd.f32 0.0, %v391
    %v393 = vpop.f32.mrf.mxu0
    %v394 = vadd.f32 0.0, %v393
    %395 = vdwg.mxu0
    %vm402 = vcmask 1043456
    %v403 = vrot.slane %v382, 4
    %v404 = vrot.slane %v384, 4
    %v405 = vsel %vm402, %v403, %v404
    %v406 = vrot.slane %v387, 4
    %v407 = vsel %vm402, %v404, %v406
    %v408 = vrot.slane %v389, 4
    %v409 = vsel %vm402, %v406, %v408
    %v410 = vrot.slane %v392, 4
    %v411 = vsel %vm402, %v408, %v410
    %v412 = vrot.slane %v394, 4
    %v413 = vsel %vm402, %v410, %v412
    %v420 = vadd.f32 %v357, %v405
    %v421 = vadd.f32 %v358, %v407
    %v422 = vadd.f32 %v359, %v409
    %v423 = vadd.f32 %v360, %v411
    %v424 = vadd.f32 %v361, %v413
    %v425 = vadd.f32 %v362, %v412
    %s426 = scalar_lea.vmem %s1, 40
    %v427 = vld [vmem:[%s426] sm:$0xf]
    %v428 = vld [vmem:[%s426 + $0x4] sm:$0xf]
    %v431 = vunpack.c.l.b16 %v427
    %v432 = vunpack.c.l.b16 %v428
    %v433 = vpack.c.b16 %v432, %v431
    %435 = vmatpush.bf16.msra.mxu0 0
    %436 = vmatpush.bf16.msra.mxu0 0
    %437 = vmatpush.bf16.msra.mxu0 0
    %438 = vmatpush.bf16.msra.mxu0 0
    %439 = vmatpush.bf16.msra.mxu0 0
    %440 = vmatpush.bf16.msra.mxu0 0
    %441 = vmatpush.bf16.msra.mxu0 0
    %442 = vmatpush.bf16.msra.mxu0 %v433
    %443 = vmatmul.bf16.gmra.mxu0 %v142
    %v444 = vpop.f32.mrf.mxu0
    %v445 = vadd.f32 0.0, %v444
    %v446 = vpop.f32.mrf.mxu0
    %v447 = vadd.f32 0.0, %v446
    %448 = vmatmul.bf16.gmra.mxu0 %v145
    %v449 = vpop.f32.mrf.mxu0
    %v450 = vadd.f32 0.0, %v449
    %v451 = vpop.f32.mrf.mxu0
    %v452 = vadd.f32 0.0, %v451
    %453 = vmatmul.bf16.gmra.mxu0 %v148
    %v454 = vpop.f32.mrf.mxu0
    %v455 = vadd.f32 0.0, %v454
    %v456 = vpop.f32.mrf.mxu0
    %v457 = vadd.f32 0.0, %v456
    %458 = vdwg.mxu0
    %vm465 = vcmask 1042432
    %v466 = vrot.slane %v445, 5
    %v467 = vrot.slane %v447, 5
    %v468 = vsel %vm465, %v466, %v467
    %v469 = vrot.slane %v450, 5
    %v470 = vsel %vm465, %v467, %v469
    %v471 = vrot.slane %v452, 5
    %v472 = vsel %vm465, %v469, %v471
    %v473 = vrot.slane %v455, 5
    %v474 = vsel %vm465, %v471, %v473
    %v475 = vrot.slane %v457, 5
    %v476 = vsel %vm465, %v473, %v475
    %v483 = vadd.f32 %v420, %v468
    %v484 = vadd.f32 %v421, %v470
    %v485 = vadd.f32 %v422, %v472
    %v486 = vadd.f32 %v423, %v474
    %v487 = vadd.f32 %v424, %v476
    %v488 = vadd.f32 %v425, %v475
    %s489 = scalar_lea.vmem %s1, 48
    %v490 = vld [vmem:[%s489] sm:$0xf]
    %v491 = vld [vmem:[%s489 + $0x4] sm:$0xf]
    %v494 = vunpack.c.l.b16 %v490
    %v495 = vunpack.c.l.b16 %v491
    %v496 = vpack.c.b16 %v495, %v494
    %498 = vmatpush.bf16.msra.mxu0 0
    %499 = vmatpush.bf16.msra.mxu0 0
    %500 = vmatpush.bf16.msra.mxu0 0
    %501 = vmatpush.bf16.msra.mxu0 0
    %502 = vmatpush.bf16.msra.mxu0 0
    %503 = vmatpush.bf16.msra.mxu0 0
    %504 = vmatpush.bf16.msra.mxu0 0
    %505 = vmatpush.bf16.msra.mxu0 %v496
    %506 = vmatmul.bf16.gmra.mxu0 %v142
    %v507 = vpop.f32.mrf.mxu0
    %v508 = vadd.f32 0.0, %v507
    %v509 = vpop.f32.mrf.mxu0
    %v510 = vadd.f32 0.0, %v509
    %511 = vmatmul.bf16.gmra.mxu0 %v145
    %v512 = vpop.f32.mrf.mxu0
    %v513 = vadd.f32 0.0, %v512
    %v514 = vpop.f32.mrf.mxu0
    %v515 = vadd.f32 0.0, %v514
    %516 = vmatmul.bf16.gmra.mxu0 %v148
    %v517 = vpop.f32.mrf.mxu0
    %v518 = vadd.f32 0.0, %v517
    %v519 = vpop.f32.mrf.mxu0
    %v520 = vadd.f32 0.0, %v519
    %521 = vdwg.mxu0
    %vm528 = vcmask 1041408
    %v529 = vrot.slane %v508, 6
    %v530 = vrot.slane %v510, 6
    %v531 = vsel %vm528, %v529, %v530
    %v532 = vrot.slane %v513, 6
    %v533 = vsel %vm528, %v530, %v532
    %v534 = vrot.slane %v515, 6
    %v535 = vsel %vm528, %v532, %v534
    %v536 = vrot.slane %v518, 6
    %v537 = vsel %vm528, %v534, %v536
    %v538 = vrot.slane %v520, 6
    %v539 = vsel %vm528, %v536, %v538
    %v546 = vadd.f32 %v483, %v531
    %v547 = vadd.f32 %v484, %v533
    %v548 = vadd.f32 %v485, %v535
    %v549 = vadd.f32 %v486, %v537
    %v550 = vadd.f32 %v487, %v539
    %v551 = vadd.f32 %v488, %v538
    %s552 = scalar_lea.vmem %s1, 56
    %v553 = vld [vmem:[%s552] sm:$0xf]
    %v554 = vld [vmem:[%s552 + $0x4] sm:$0xf]
    %v557 = vunpack.c.l.b16 %v553
    %v558 = vunpack.c.l.b16 %v554
    %v559 = vpack.c.b16 %v558, %v557
    %561 = vmatpush.bf16.msra.mxu0 0
    %562 = vmatpush.bf16.msra.mxu0 0
    %563 = vmatpush.bf16.msra.mxu0 0
    %564 = vmatpush.bf16.msra.mxu0 0
    %565 = vmatpush.bf16.msra.mxu0 0
    %566 = vmatpush.bf16.msra.mxu0 0
    %567 = vmatpush.bf16.msra.mxu0 0
    %568 = vmatpush.bf16.msra.mxu0 %v559
    %569 = vmatmul.bf16.gmra.mxu0 %v142
    %v570 = vpop.f32.mrf.mxu0
    %v571 = vadd.f32 0.0, %v570
    %v572 = vpop.f32.mrf.mxu0
    %v573 = vadd.f32 0.0, %v572
    %574 = vmatmul.bf16.gmra.mxu0 %v145
    %v575 = vpop.f32.mrf.mxu0
    %v576 = vadd.f32 0.0, %v575
    %v577 = vpop.f32.mrf.mxu0
    %v578 = vadd.f32 0.0, %v577
    %579 = vmatmul.bf16.gmra.mxu0 %v148
    %v580 = vpop.f32.mrf.mxu0
    %v581 = vadd.f32 0.0, %v580
    %v582 = vpop.f32.mrf.mxu0
    %v583 = vadd.f32 0.0, %v582
    %584 = vdwg.mxu0
    %vm591 = vcmask 1040384
    %v592 = vrot.slane %v571, 7
    %v593 = vrot.slane %v573, 7
    %v594 = vsel %vm591, %v592, %v593
    %v595 = vrot.slane %v576, 7
    %v596 = vsel %vm591, %v593, %v595
    %v597 = vrot.slane %v578, 7
    %v598 = vsel %vm591, %v595, %v597
    %v599 = vrot.slane %v581, 7
    %v600 = vsel %vm591, %v597, %v599
    %v601 = vrot.slane %v583, 7
    %v602 = vsel %vm591, %v599, %v601
    %v609 = vadd.f32 %v546, %v594
    %v610 = vadd.f32 %v547, %v596
    %v611 = vadd.f32 %v548, %v598
    %v612 = vadd.f32 %v549, %v600
    %v613 = vadd.f32 %v550, %v602
    %v614 = vadd.f32 %v551, %v601
    %v615 = vld [vmem:[%s4] sm:$0x1]
    %v616 = vperm.slane %v615, 0
    %v617 = vadd.f32 %v609, %v616
    %v618 = vadd.f32 %v610, %v616
    %v619 = vadd.f32 %v611, %v616
    %v620 = vadd.f32 %v612, %v616
    %v621 = vadd.f32 %v613, %v616
    %v622 = vadd.f32 %v614, %v616
    %v623 = vmax.f32 %v617, 0.0
    %v624 = vmax.f32 %v618, 0.0
    %v625 = vmax.f32 %v619, 0.0
    %v626 = vmax.f32 %v620, 0.0
    %v627 = vmax.f32 %v621, 0.0
    %v628 = vmax.f32 %v622, 0.0
    %v632 = vrot.slane %v623, 7
    %v633 = vrot.slane %v624, 7
    %v634 = vsel %vm591, %v632, %v633
    %v635 = vrot.slane %v625, 7
    %v636 = vsel %vm591, %v633, %v635
    %v640 = vsel %vm591, 0.0, %v632
    %641 = vst [vmem:[#allocation4] sm:$0xff] %v640
    %642 = vst [vmem:[#allocation4 + $0x8] sm:$0xff] %v634
    %643 = vst [vmem:[#allocation4 + $0x10] sm:$0x3] %v636
    %v647 = vrot.slane %v626, 7
    %v648 = vrot.slane %v627, 7
    %v649 = vsel %vm591, %v647, %v648
    %v650 = vrot.slane %v628, 7
    %v651 = vsel %vm591, %v648, %v650
    %v655 = vsel %vm591, 0.0, %v647
    %656 = vst [vmem:[#allocation4 + $0x18] sm:$0xff] %v655
    %657 = vst [vmem:[#allocation4 + $0x20] sm:$0xff] %v649
    %658 = vst [vmem:[#allocation4 + $0x28] sm:$0x3] %v651
    %v659 = vld [vmem:[#allocation4] ss:$2 sm:$0xff]
    %s660 = scalar_lea.vmem [#allocation4], 16
    %v661 = vld [vmem:[%s660] ss:$2 sm:$0xff]
    %s662 = scalar_lea.vmem [#allocation4], 32
    %v663 = vld [vmem:[%s662] ss:$2 sm:$0x1f]
    %s664 = scalar_lea.vmem [#allocation4], 1
    %v665 = vld [vmem:[%s664] ss:$2 sm:$0xff]
    %s666 = scalar_lea.vmem [#allocation4], 17
    %v667 = vld [vmem:[%s666] ss:$2 sm:$0xff]
    %s668 = scalar_lea.vmem [#allocation4], 33
    %v669 = vld [vmem:[%s668] ss:$2 sm:$0x1f]
    %v670 = vmax.f32 %v659, %v665
    %v671 = vmax.f32 %v661, %v667
    %v672 = vmax.f32 %v663, %v669
    %673 = vst [vmem:[#allocation2 + $0x4] sm:$0xff] %v670
    %674 = vst [vmem:[#allocation2 + $0xc] sm:$0x1] %v671
    %675 = vst [vmem:[#allocation2 + $0x18] sm:$0xf0] %v671
    %676 = vst [vmem:[#allocation2 + $0x20] sm:$0x1f] %v672
    %v677 = vld [vmem:[#allocation2] sm:$0xff]
    %v678 = vld [vmem:[#allocation2 + $0x8] sm:$0xff]
    %v679 = vld [vmem:[#allocation2 + $0x10] sm:$0xff]
    %v680 = vld [vmem:[#allocation2 + $0x18] sm:$0xff]
    %v681 = vld [vmem:[#allocation2 + $0x20] sm:$0xff]
    %v682 = vld [vmem:[#allocation2 + $0x28] sm:$0xff]
    %v683 = vpack.c.bf16 %v678, %v677
    %v684 = vpack.c.bf16 %v680, %v679
    %v685 = vpack.c.bf16 %v682, %v681
    %v686 = vld [vmem:[#allocation5] sm:$0xf]
    %v687 = vld [vmem:[#allocation5 + $0x4] sm:$0xf]
    %v688 = vld [vmem:[#allocation5 + $0x8] sm:$0xf]
    %v689 = vld [vmem:[#allocation5 + $0xc] sm:$0xf]
    %v694 = vunpack.c.l.b16 %v686
    %v695 = vunpack.c.l.b16 %v687
    %v696 = vunpack.c.l.b16 %v688
    %v697 = vunpack.c.l.b16 %v689
    %v698 = vpack.c.b16 %v695, %v694
    %v699 = vpack.c.b16 %v697, %v696
    %vm702 = vcmask 261120
    %v704 = vsel %vm702, %v683, 0
    %v707 = vsel %vm702, %v684, 0
    %v710 = vsel %vm702, %v685, 0
    %712 = vmatpush.bf16.msra.mxu0 0
    %713 = vmatpush.bf16.msra.mxu0 0
    %714 = vmatpush.bf16.msra.mxu0 0
    %715 = vmatpush.bf16.msra.mxu0 0
    %716 = vmatpush.bf16.msra.mxu0 0
    %717 = vmatpush.bf16.msra.mxu0 0
    %718 = vmatpush.bf16.msra.mxu0 %v699
    %719 = vmatpush.bf16.msra.mxu0 %v698
    %720 = vmatmul.bf16.gmra.mxu0 %v704
    %v721 = vpop.f32.mrf.mxu0
    %v722 = vadd.f32 0.0, %v721
    %v723 = vpop.f32.mrf.mxu0
    %v724 = vadd.f32 0.0, %v723
    %725 = vmatmul.bf16.gmra.mxu0 %v707
    %v726 = vpop.f32.mrf.mxu0
    %v727 = vpop.f32.mrf.mxu0
    %v728 = vadd.f32 0.0, %v727
    %729 = vmatmul.bf16.gmra.mxu0 %v710
    %v730 = vpop.f32.mrf.mxu0
    %v731 = vadd.f32 0.0, %v730
    %v732 = vpop.f32.mrf.mxu0
    %733 = vdwg.mxu0
    %s734 = scalar_lea.vmem [#allocation5], 16
    %v735 = vld [vmem:[%s734] sm:$0xf]
    %v736 = vld [vmem:[%s734 + $0x4] sm:$0xf]
    %v737 = vld [vmem:[%s734 + $0x8] sm:$0xf]
    %v738 = vld [vmem:[%s734 + $0xc] sm:$0xf]
    %v743 = vunpack.c.l.b16 %v735
    %v744 = vunpack.c.l.b16 %v736
    %v745 = vunpack.c.l.b16 %v737
    %v746 = vunpack.c.l.b16 %v738
    %v747 = vpack.c.b16 %v744, %v743
    %v748 = vpack.c.b16 %v746, %v745
    %751 = vmatpush.bf16.msra.mxu0 0
    %752 = vmatpush.bf16.msra.mxu0 0
    %753 = vmatpush.bf16.msra.mxu0 0
    %754 = vmatpush.bf16.msra.mxu0 0
    %755 = vmatpush.bf16.msra.mxu0 0
    %756 = vmatpush.bf16.msra.mxu0 0
    %757 = vmatpush.bf16.msra.mxu0 %v748
    %758 = vmatpush.bf16.msra.mxu0 %v747
    %759 = vmatmul.bf16.gmra.mxu0 %v704
    %v760 = vpop.f32.mrf.mxu0
    %v761 = vadd.f32 0.0, %v760
    %v762 = vpop.f32.mrf.mxu0
    %v763 = vadd.f32 0.0, %v762
    %764 = vmatmul.bf16.gmra.mxu0 %v707
    %v765 = vpop.f32.mrf.mxu0
    %v766 = vadd.f32 0.0, %v765
    %v767 = vpop.f32.mrf.mxu0
    %v768 = vadd.f32 0.0, %v767
    %769 = vmatmul.bf16.gmra.mxu0 %v710
    %v770 = vpop.f32.mrf.mxu0
    %v771 = vadd.f32 0.0, %v770
    %v772 = vpop.f32.mrf.mxu0
    %773 = vdwg.mxu0
    %v779 = vrot.slane %v761, 1
    %v780 = vrot.slane %v763, 1
    %v781 = vsel %vm213, %v779, %v780
    %v782 = vrot.slane %v766, 1
    %v783 = vsel %vm213, %v780, %v782
    %v784 = vrot.slane %v768, 1
    %v785 = vrot.slane %v771, 1
    %v786 = vsel %vm213, %v784, %v785
    %v791 = vadd.f32 %v722, %v781
    %v792 = vadd.f32 %v724, %v783
    %v793 = vadd.f32 %v728, %v786
    %v794 = vadd.f32 %v731, %v785
    %s795 = scalar_lea.vmem [#allocation5], 32
    %v796 = vld [vmem:[%s795] sm:$0xf]
    %v797 = vld [vmem:[%s795 + $0x4] sm:$0xf]
    %v798 = vld [vmem:[%s795 + $0x8] sm:$0xf]
    %v799 = vld [vmem:[%s795 + $0xc] sm:$0xf]
    %v804 = vunpack.c.l.b16 %v796
    %v805 = vunpack.c.l.b16 %v797
    %v806 = vunpack.c.l.b16 %v798
    %v807 = vunpack.c.l.b16 %v799
    %v808 = vpack.c.b16 %v805, %v804
    %v809 = vpack.c.b16 %v807, %v806
    %812 = vmatpush.bf16.msra.mxu0 0
    %813 = vmatpush.bf16.msra.mxu0 0
    %814 = vmatpush.bf16.msra.mxu0 0
    %815 = vmatpush.bf16.msra.mxu0 0
    %816 = vmatpush.bf16.msra.mxu0 0
    %817 = vmatpush.bf16.msra.mxu0 0
    %818 = vmatpush.bf16.msra.mxu0 %v809
    %819 = vmatpush.bf16.msra.mxu0 %v808
    %820 = vmatmul.bf16.gmra.mxu0 %v704
    %v821 = vpop.f32.mrf.mxu0
    %v822 = vadd.f32 0.0, %v821
    %v823 = vpop.f32.mrf.mxu0
    %v824 = vadd.f32 0.0, %v823
    %825 = vmatmul.bf16.gmra.mxu0 %v707
    %v826 = vpop.f32.mrf.mxu0
    %v827 = vadd.f32 0.0, %v826
    %v828 = vpop.f32.mrf.mxu0
    %v829 = vadd.f32 0.0, %v828
    %830 = vmatmul.bf16.gmra.mxu0 %v710
    %v831 = vpop.f32.mrf.mxu0
    %v832 = vadd.f32 0.0, %v831
    %v833 = vpop.f32.mrf.mxu0
    %834 = vdwg.mxu0
    %v840 = vrot.slane %v822, 2
    %v841 = vrot.slane %v824, 2
    %v842 = vsel %vm276, %v840, %v841
    %v843 = vrot.slane %v827, 2
    %v844 = vsel %vm276, %v841, %v843
    %v845 = vrot.slane %v829, 2
    %v846 = vrot.slane %v832, 2
    %v847 = vsel %vm276, %v845, %v846
    %v852 = vadd.f32 %v791, %v842
    %v853 = vadd.f32 %v792, %v844
    %v854 = vadd.f32 %v793, %v847
    %v855 = vadd.f32 %v794, %v846
    %s856 = scalar_lea.vmem [#allocation5], 48
    %v857 = vld [vmem:[%s856] sm:$0xf]
    %v858 = vld [vmem:[%s856 + $0x4] sm:$0xf]
    %v859 = vld [vmem:[%s856 + $0x8] sm:$0xf]
    %v860 = vld [vmem:[%s856 + $0xc] sm:$0xf]
    %v865 = vunpack.c.l.b16 %v857
    %v866 = vunpack.c.l.b16 %v858
    %v867 = vunpack.c.l.b16 %v859
    %v868 = vunpack.c.l.b16 %v860
    %v869 = vpack.c.b16 %v866, %v865
    %v870 = vpack.c.b16 %v868, %v867
    %873 = vmatpush.bf16.msra.mxu0 0
    %874 = vmatpush.bf16.msra.mxu0 0
    %875 = vmatpush.bf16.msra.mxu0 0
    %876 = vmatpush.bf16.msra.mxu0 0
    %877 = vmatpush.bf16.msra.mxu0 0
    %878 = vmatpush.bf16.msra.mxu0 0
    %879 = vmatpush.bf16.msra.mxu0 %v870
    %880 = vmatpush.bf16.msra.mxu0 %v869
    %881 = vmatmul.bf16.gmra.mxu0 %v704
    %v882 = vpop.f32.mrf.mxu0
    %v883 = vadd.f32 0.0, %v882
    %v884 = vpop.f32.mrf.mxu0
    %v885 = vadd.f32 0.0, %v884
    %886 = vmatmul.bf16.gmra.mxu0 %v707
    %v887 = vpop.f32.mrf.mxu0
    %v888 = vadd.f32 0.0, %v887
    %v889 = vpop.f32.mrf.mxu0
    %v890 = vadd.f32 0.0, %v889
    %891 = vmatmul.bf16.gmra.mxu0 %v710
    %v892 = vpop.f32.mrf.mxu0
    %v893 = vadd.f32 0.0, %v892
    %v894 = vpop.f32.mrf.mxu0
    %895 = vdwg.mxu0
    %v901 = vrot.slane %v883, 3
    %v902 = vrot.slane %v885, 3
    %v903 = vsel %vm339, %v901, %v902
    %v904 = vrot.slane %v888, 3
    %v905 = vsel %vm339, %v902, %v904
    %v906 = vrot.slane %v890, 3
    %v907 = vrot.slane %v893, 3
    %v908 = vsel %vm339, %v906, %v907
    %v913 = vadd.f32 %v852, %v903
    %v914 = vadd.f32 %v853, %v905
    %v915 = vadd.f32 %v854, %v908
    %v916 = vadd.f32 %v855, %v907
    %s917 = scalar_lea.vmem [#allocation5], 64
    %v918 = vld [vmem:[%s917] sm:$0xf]
    %v919 = vld [vmem:[%s917 + $0x4] sm:$0xf]
    %v920 = vld [vmem:[%s917 + $0x8] sm:$0xf]
    %v921 = vld [vmem:[%s917 + $0xc] sm:$0xf]
    %v926 = vunpack.c.l.b16 %v918
    %v927 = vunpack.c.l.b16 %v919
    %v928 = vunpack.c.l.b16 %v920
    %v929 = vunpack.c.l.b16 %v921
    %v930 = vpack.c.b16 %v927, %v926
    %v931 = vpack.c.b16 %v929, %v928
    %934 = vmatpush.bf16.msra.mxu0 0
    %935 = vmatpush.bf16.msra.mxu0 0
    %936 = vmatpush.bf16.msra.mxu0 0
    %937 = vmatpush.bf16.msra.mxu0 0
    %938 = vmatpush.bf16.msra.mxu0 0
    %939 = vmatpush.bf16.msra.mxu0 0
    %940 = vmatpush.bf16.msra.mxu0 %v931
    %941 = vmatpush.bf16.msra.mxu0 %v930
    %942 = vmatmul.bf16.gmra.mxu0 %v704
    %v943 = vpop.f32.mrf.mxu0
    %v944 = vadd.f32 0.0, %v943
    %v945 = vpop.f32.mrf.mxu0
    %v946 = vadd.f32 0.0, %v945
    %947 = vmatmul.bf16.gmra.mxu0 %v707
    %v948 = vpop.f32.mrf.mxu0
    %v949 = vadd.f32 0.0, %v948
    %v950 = vpop.f32.mrf.mxu0
    %v951 = vadd.f32 0.0, %v950
    %952 = vmatmul.bf16.gmra.mxu0 %v710
    %v953 = vpop.f32.mrf.mxu0
    %v954 = vadd.f32 0.0, %v953
    %v955 = vpop.f32.mrf.mxu0
    %956 = vdwg.mxu0
    %v962 = vrot.slane %v944, 4
    %v963 = vrot.slane %v946, 4
    %v964 = vsel %vm402, %v962, %v963
    %v965 = vrot.slane %v949, 4
    %v966 = vsel %vm402, %v963, %v965
    %v967 = vrot.slane %v951, 4
    %v968 = vrot.slane %v954, 4
    %v969 = vsel %vm402, %v967, %v968
    %v974 = vadd.f32 %v913, %v964
    %v975 = vadd.f32 %v914, %v966
    %v976 = vadd.f32 %v915, %v969
    %v977 = vadd.f32 %v916, %v968
    %s978 = scalar_lea.vmem [#allocation5], 80
    %v979 = vld [vmem:[%s978] sm:$0xf]
    %v980 = vld [vmem:[%s978 + $0x4] sm:$0xf]
    %v981 = vld [vmem:[%s978 + $0x8] sm:$0xf]
    %v982 = vld [vmem:[%s978 + $0xc] sm:$0xf]
    %v987 = vunpack.c.l.b16 %v979
    %v988 = vunpack.c.l.b16 %v980
    %v989 = vunpack.c.l.b16 %v981
    %v990 = vunpack.c.l.b16 %v982
    %v991 = vpack.c.b16 %v988, %v987
    %v992 = vpack.c.b16 %v990, %v989
    %995 = vmatpush.bf16.msra.mxu0 0
    %996 = vmatpush.bf16.msra.mxu0 0
    %997 = vmatpush.bf16.msra.mxu0 0
    %998 = vmatpush.bf16.msra.mxu0 0
    %999 = vmatpush.bf16.msra.mxu0 0
    %1000 = vmatpush.bf16.msra.mxu0 0
    %1001 = vmatpush.bf16.msra.mxu0 %v992
    %1002 = vmatpush.bf16.msra.mxu0 %v991
    %1003 = vmatmul.bf16.gmra.mxu0 %v704
    %v1004 = vpop.f32.mrf.mxu0
    %v1005 = vadd.f32 0.0, %v1004
    %v1006 = vpop.f32.mrf.mxu0
    %v1007 = vadd.f32 0.0, %v1006
    %1008 = vmatmul.bf16.gmra.mxu0 %v707
    %v1009 = vpop.f32.mrf.mxu0
    %v1010 = vadd.f32 0.0, %v1009
    %v1011 = vpop.f32.mrf.mxu0
    %v1012 = vadd.f32 0.0, %v1011
    %1013 = vmatmul.bf16.gmra.mxu0 %v710
    %v1014 = vpop.f32.mrf.mxu0
    %v1015 = vadd.f32 0.0, %v1014
    %v1016 = vpop.f32.mrf.mxu0
    %1017 = vdwg.mxu0
    %v1023 = vrot.slane %v1005, 5
    %v1024 = vrot.slane %v1007, 5
    %v1025 = vsel %vm465, %v1023, %v1024
    %v1026 = vrot.slane %v1010, 5
    %v1027 = vsel %vm465, %v1024, %v1026
    %v1028 = vrot.slane %v1012, 5
    %v1029 = vrot.slane %v1015, 5
    %v1030 = vsel %vm465, %v1028, %v1029
    %v1035 = vadd.f32 %v974, %v1025
    %v1036 = vadd.f32 %v975, %v1027
    %v1037 = vadd.f32 %v976, %v1030
    %v1038 = vadd.f32 %v977, %v1029
    %s1039 = scalar_lea.vmem [#allocation5], 96
    %v1040 = vld [vmem:[%s1039] sm:$0xf]
    %v1041 = vld [vmem:[%s1039 + $0x4] sm:$0xf]
    %v1042 = vld [vmem:[%s1039 + $0x8] sm:$0xf]
    %v1043 = vld [vmem:[%s1039 + $0xc] sm:$0xf]
    %v1048 = vunpack.c.l.b16 %v1040
    %v1049 = vunpack.c.l.b16 %v1041
    %v1050 = vunpack.c.l.b16 %v1042
    %v1051 = vunpack.c.l.b16 %v1043
    %v1052 = vpack.c.b16 %v1049, %v1048
    %v1053 = vpack.c.b16 %v1051, %v1050
    %1056 = vmatpush.bf16.msra.mxu0 0
    %1057 = vmatpush.bf16.msra.mxu0 0
    %1058 = vmatpush.bf16.msra.mxu0 0
    %1059 = vmatpush.bf16.msra.mxu0 0
    %1060 = vmatpush.bf16.msra.mxu0 0
    %1061 = vmatpush.bf16.msra.mxu0 0
    %1062 = vmatpush.bf16.msra.mxu0 %v1053
    %1063 = vmatpush.bf16.msra.mxu0 %v1052
    %1064 = vmatmul.bf16.gmra.mxu0 %v704
    %v1065 = vpop.f32.mrf.mxu0
    %v1066 = vadd.f32 0.0, %v1065
    %v1067 = vpop.f32.mrf.mxu0
    %v1068 = vadd.f32 0.0, %v1067
    %1069 = vmatmul.bf16.gmra.mxu0 %v707
    %v1070 = vpop.f32.mrf.mxu0
    %v1071 = vadd.f32 0.0, %v1070
    %v1072 = vpop.f32.mrf.mxu0
    %v1073 = vadd.f32 0.0, %v1072
    %1074 = vmatmul.bf16.gmra.mxu0 %v710
    %v1075 = vpop.f32.mrf.mxu0
    %v1076 = vadd.f32 0.0, %v1075
    %v1077 = vpop.f32.mrf.mxu0
    %1078 = vdwg.mxu0
    %v1084 = vrot.slane %v1066, 6
    %v1085 = vrot.slane %v1068, 6
    %v1086 = vsel %vm528, %v1084, %v1085
    %v1087 = vrot.slane %v1071, 6
    %v1088 = vsel %vm528, %v1085, %v1087
    %v1089 = vrot.slane %v1073, 6
    %v1090 = vrot.slane %v1076, 6
    %v1091 = vsel %vm528, %v1089, %v1090
    %v1096 = vadd.f32 %v1035, %v1086
    %v1097 = vadd.f32 %v1036, %v1088
    %v1098 = vadd.f32 %v1037, %v1091
    %v1099 = vadd.f32 %v1038, %v1090
    %s1100 = scalar_lea.vmem [#allocation5], 112
    %v1101 = vld [vmem:[%s1100] sm:$0xf]
    %v1102 = vld [vmem:[%s1100 + $0x4] sm:$0xf]
    %v1103 = vld [vmem:[%s1100 + $0x8] sm:$0xf]
    %v1104 = vld [vmem:[%s1100 + $0xc] sm:$0xf]
    %v1109 = vunpack.c.l.b16 %v1101
    %v1110 = vunpack.c.l.b16 %v1102
    %v1111 = vunpack.c.l.b16 %v1103
    %v1112 = vunpack.c.l.b16 %v1104
    %v1113 = vpack.c.b16 %v1110, %v1109
    %v1114 = vpack.c.b16 %v1112, %v1111
    %1117 = vmatpush.bf16.msra.mxu0 0
    %1118 = vmatpush.bf16.msra.mxu0 0
    %1119 = vmatpush.bf16.msra.mxu0 0
    %1120 = vmatpush.bf16.msra.mxu0 0
    %1121 = vmatpush.bf16.msra.mxu0 0
    %1122 = vmatpush.bf16.msra.mxu0 0
    %1123 = vmatpush.bf16.msra.mxu0 %v1114
    %1124 = vmatpush.bf16.msra.mxu0 %v1113
    %1125 = vmatmul.bf16.gmra.mxu0 %v704
    %v1126 = vpop.f32.mrf.mxu0
    %v1127 = vadd.f32 0.0, %v1126
    %v1128 = vpop.f32.mrf.mxu0
    %v1129 = vadd.f32 0.0, %v1128
    %1130 = vmatmul.bf16.gmra.mxu0 %v707
    %v1131 = vpop.f32.mrf.mxu0
    %v1132 = vadd.f32 0.0, %v1131
    %v1133 = vpop.f32.mrf.mxu0
    %v1134 = vadd.f32 0.0, %v1133
    %1135 = vmatmul.bf16.gmra.mxu0 %v710
    %v1136 = vpop.f32.mrf.mxu0
    %v1137 = vadd.f32 0.0, %v1136
    %v1138 = vpop.f32.mrf.mxu0
    %v1139 = vadd.f32 0.0, %v1138
    %1140 = vdwg.mxu0
    %v1147 = vrot.slane %v1127, 7
    %v1148 = vrot.slane %v1129, 7
    %v1149 = vsel %vm591, %v1147, %v1148
    %v1150 = vrot.slane %v1132, 7
    %v1151 = vsel %vm591, %v1148, %v1150
    %v1152 = vrot.slane %v1134, 7
    %v1153 = vrot.slane %v1137, 7
    %v1154 = vsel %vm591, %v1152, %v1153
    %v1155 = vrot.slane %v1139, 7
    %v1156 = vsel %vm591, %v1153, %v1155
    %v1161 = vadd.f32 %v1096, %v1149
    %v1162 = vadd.f32 %v1097, %v1151
    %v1163 = vadd.f32 %v1098, %v1154
    %v1164 = vadd.f32 %v1099, %v1156
    %v1165 = vld [vmem:[%s4 + $0x1] sm:$0x1]
    %v1166 = vperm.slane %v1165, 0
    %v1167 = vadd.f32 %v1161, %v1166
    %v1168 = vadd.f32 %v1162, %v1166
    %v1169 = vadd.f32 %v1163, %v1166
    %v1170 = vadd.f32 %v1164, %v1166
    %v1171 = vmax.f32 %v1167, 0.0
    %v1172 = vmax.f32 %v1168, 0.0
    %v1173 = vmax.f32 %v1169, 0.0
    %v1174 = vmax.f32 %v1170, 0.0
    %v1177 = vrot.slane %v1171, 7
    %v1178 = vrot.slane %v1172, 7
    %v1179 = vsel %vm591, %v1177, %v1178
    %v1182 = vsel %vm591, 0.0, %v1177
    %v1183 = vsel %vm465, %v1179, 0.0
    %1184 = vst [vmem:[#allocation4] sm:$0xff] %v1182
    %1185 = vst [vmem:[#allocation4 + $0x8] sm:$0xf] %v1183
    %v1188 = vrot.slane %v1173, 7
    %v1189 = vrot.slane %v1174, 7
    %v1190 = vsel %vm591, %v1188, %v1189
    %v1193 = vsel %vm591, 0.0, %v1188
    %v1194 = vsel %vm465, %v1190, 0.0
    %1195 = vst [vmem:[#allocation4 + $0x18] sm:$0xff] %v1193
    %1196 = vst [vmem:[#allocation4 + $0x20] sm:$0xf] %v1194
    %v1197 = vld [vmem:[#allocation4] ss:$2 sm:$0xff]
    %v1198 = vld [vmem:[%s660] ss:$2 sm:$0xff]
    %v1199 = vld [vmem:[%s662] ss:$2 sm:$0x3]
    %v1200 = vld [vmem:[%s664] ss:$2 sm:$0xff]
    %v1201 = vld [vmem:[%s666] ss:$2 sm:$0xff]
    %v1202 = vld [vmem:[%s668] ss:$2 sm:$0x3]
    %v1203 = vmax.f32 %v1197, %v1200
    %v1204 = vmax.f32 %v1198, %v1201
    %v1205 = vmax.f32 %v1199, %v1202
    %1206 = vst [vmem:[#allocation3 + $0x4] sm:$0x3f] %v1203
    %1207 = vst [vmem:[#allocation3 + $0x18] sm:$0xf0] %v1204
    %1208 = vst [vmem:[#allocation3 + $0x20] sm:$0x3] %v1205
    %v1209 = vld [vmem:[#allocation3] sm:$0xff]
    %v1210 = vld [vmem:[#allocation3 + $0x8] sm:$0xff]
    %v1211 = vld [vmem:[#allocation3 + $0x10] sm:$0xff]
    %v1212 = vld [vmem:[#allocation3 + $0x18] sm:$0xff]
    %v1213 = vld [vmem:[#allocation3 + $0x20] sm:$0xff]
    %v1214 = vld [vmem:[#allocation3 + $0x28] sm:$0xff]
    %v1215 = vpack.c.bf16 %v1210, %v1209
    %v1216 = vpack.c.bf16 %v1212, %v1211
    %v1217 = vpack.c.bf16 %v1214, %v1213
    %v1218 = vld [vmem:[#allocation8] sm:$0xf]
    %v1219 = vld [vmem:[#allocation8 + $0x4] sm:$0xf]
    %v1220 = vld [vmem:[#allocation8 + $0x8] sm:$0xf]
    %v1221 = vld [vmem:[#allocation8 + $0xc] sm:$0xf]
    %v1222 = vld [vmem:[#allocation8 + $0x10] sm:$0xf]
    %v1223 = vld [vmem:[#allocation8 + $0x14] sm:$0xf]
    %v1224 = vld [vmem:[#allocation8 + $0x18] sm:$0xf]
    %v1225 = vld [vmem:[#allocation8 + $0x1c] sm:$0xf]
    %v1234 = vunpack.c.l.b16 %v1218
    %v1235 = vunpack.c.l.b16 %v1219
    %v1236 = vunpack.c.l.b16 %v1220
    %v1237 = vunpack.c.l.b16 %v1221
    %v1238 = vunpack.c.l.b16 %v1222
    %v1239 = vunpack.c.l.b16 %v1223
    %v1240 = vunpack.c.l.b16 %v1224
    %v1241 = vunpack.c.l.b16 %v1225
    %v1242 = vpack.c.b16 %v1235, %v1234
    %v1243 = vpack.c.b16 %v1237, %v1236
    %v1244 = vpack.c.b16 %v1239, %v1238
    %v1245 = vpack.c.b16 %v1241, %v1240
    %vm1250 = vcmask 523264
    %v1252 = vsel %vm1250, %v1215, 0
    %v1255 = vsel %vm1250, %v1216, 0
    %v1258 = vsel %vm1250, %v1217, 0
    %1260 = vmatpush.bf16.msra.mxu0 0
    %1261 = vmatpush.bf16.msra.mxu0 0
    %1262 = vmatpush.bf16.msra.mxu0 0
    %1263 = vmatpush.bf16.msra.mxu0 0
    %1264 = vmatpush.bf16.msra.mxu0 %v1245
    %1265 = vmatpush.bf16.msra.mxu0 %v1244
    %1266 = vmatpush.bf16.msra.mxu0 %v1243
    %1267 = vmatpush.bf16.msra.mxu0 %v1242
    %1268 = vmatmul.bf16.gmra.mxu0 %v1252
    %v1269 = vpop.f32.mrf.mxu0
    %v1270 = vadd.f32 0.0, %v1269
    %v1271 = vpop.f32.mrf.mxu0
    %1272 = vmatmul.bf16.gmra.mxu0 %v1255
    %v1273 = vpop.f32.mrf.mxu0
    %v1274 = vpop.f32.mrf.mxu0
    %v1275 = vadd.f32 0.0, %v1274
    %1276 = vmatmul.bf16.gmra.mxu0 %v1258
    %v1277 = vpop.f32.mrf.mxu0
    %v1278 = vpop.f32.mrf.mxu0
    %1279 = vdwg.mxu0
    %s1280 = scalar_lea.vmem [#allocation8], 32
    %v1281 = vld [vmem:[%s1280] sm:$0xf]
    %v1282 = vld [vmem:[%s1280 + $0x4] sm:$0xf]
    %v1283 = vld [vmem:[%s1280 + $0x8] sm:$0xf]
    %v1284 = vld [vmem:[%s1280 + $0xc] sm:$0xf]
    %v1285 = vld [vmem:[%s1280 + $0x10] sm:$0xf]
    %v1286 = vld [vmem:[%s1280 + $0x14] sm:$0xf]
    %v1287 = vld [vmem:[%s1280 + $0x18] sm:$0xf]
    %v1288 = vld [vmem:[%s1280 + $0x1c] sm:$0xf]
    %v1297 = vunpack.c.l.b16 %v1281
    %v1298 = vunpack.c.l.b16 %v1282
    %v1299 = vunpack.c.l.b16 %v1283
    %v1300 = vunpack.c.l.b16 %v1284
    %v1301 = vunpack.c.l.b16 %v1285
    %v1302 = vunpack.c.l.b16 %v1286
    %v1303 = vunpack.c.l.b16 %v1287
    %v1304 = vunpack.c.l.b16 %v1288
    %v1305 = vpack.c.b16 %v1298, %v1297
    %v1306 = vpack.c.b16 %v1300, %v1299
    %v1307 = vpack.c.b16 %v1302, %v1301
    %v1308 = vpack.c.b16 %v1304, %v1303
    %1313 = vmatpush.bf16.msra.mxu0 0
    %1314 = vmatpush.bf16.msra.mxu0 0
    %1315 = vmatpush.bf16.msra.mxu0 0
    %1316 = vmatpush.bf16.msra.mxu0 0
    %1317 = vmatpush.bf16.msra.mxu0 %v1308
    %1318 = vmatpush.bf16.msra.mxu0 %v1307
    %1319 = vmatpush.bf16.msra.mxu0 %v1306
    %1320 = vmatpush.bf16.msra.mxu0 %v1305
    %1321 = vmatmul.bf16.gmra.mxu0 %v1252
    %v1322 = vpop.f32.mrf.mxu0
    %v1323 = vadd.f32 0.0, %v1322
    %v1324 = vpop.f32.mrf.mxu0
    %v1325 = vadd.f32 0.0, %v1324
    %1326 = vmatmul.bf16.gmra.mxu0 %v1255
    %v1327 = vpop.f32.mrf.mxu0
    %v1328 = vpop.f32.mrf.mxu0
    %v1329 = vadd.f32 0.0, %v1328
    %1330 = vmatmul.bf16.gmra.mxu0 %v1258
    %v1331 = vpop.f32.mrf.mxu0
    %v1332 = vpop.f32.mrf.mxu0
    %1333 = vdwg.mxu0
    %v1337 = vrot.slane %v1323, 1
    %v1338 = vrot.slane %v1325, 1
    %v1339 = vsel %vm213, %v1337, %v1338
    %v1340 = vrot.slane %v1329, 1
    %v1343 = vadd.f32 %v1270, %v1339
    %v1344 = vadd.f32 %v1275, %v1340
    %s1345 = scalar_lea.vmem [#allocation8], 64
    %v1346 = vld [vmem:[%s1345] sm:$0xf]
    %v1347 = vld [vmem:[%s1345 + $0x4] sm:$0xf]
    %v1348 = vld [vmem:[%s1345 + $0x8] sm:$0xf]
    %v1349 = vld [vmem:[%s1345 + $0xc] sm:$0xf]
    %v1350 = vld [vmem:[%s1345 + $0x10] sm:$0xf]
    %v1351 = vld [vmem:[%s1345 + $0x14] sm:$0xf]
    %v1352 = vld [vmem:[%s1345 + $0x18] sm:$0xf]
    %v1353 = vld [vmem:[%s1345 + $0x1c] sm:$0xf]
    %v1362 = vunpack.c.l.b16 %v1346
    %v1363 = vunpack.c.l.b16 %v1347
    %v1364 = vunpack.c.l.b16 %v1348
    %v1365 = vunpack.c.l.b16 %v1349
    %v1366 = vunpack.c.l.b16 %v1350
    %v1367 = vunpack.c.l.b16 %v1351
    %v1368 = vunpack.c.l.b16 %v1352
    %v1369 = vunpack.c.l.b16 %v1353
    %v1370 = vpack.c.b16 %v1363, %v1362
    %v1371 = vpack.c.b16 %v1365, %v1364
    %v1372 = vpack.c.b16 %v1367, %v1366
    %v1373 = vpack.c.b16 %v1369, %v1368
    %1378 = vmatpush.bf16.msra.mxu0 0
    %1379 = vmatpush.bf16.msra.mxu0 0
    %1380 = vmatpush.bf16.msra.mxu0 0
    %1381 = vmatpush.bf16.msra.mxu0 0
    %1382 = vmatpush.bf16.msra.mxu0 %v1373
    %1383 = vmatpush.bf16.msra.mxu0 %v1372
    %1384 = vmatpush.bf16.msra.mxu0 %v1371
    %1385 = vmatpush.bf16.msra.mxu0 %v1370
    %1386 = vmatmul.bf16.gmra.mxu0 %v1252
    %v1387 = vpop.f32.mrf.mxu0
    %v1388 = vadd.f32 0.0, %v1387
    %v1389 = vpop.f32.mrf.mxu0
    %v1390 = vadd.f32 0.0, %v1389
    %1391 = vmatmul.bf16.gmra.mxu0 %v1255
    %v1392 = vpop.f32.mrf.mxu0
    %v1393 = vpop.f32.mrf.mxu0
    %v1394 = vadd.f32 0.0, %v1393
    %1395 = vmatmul.bf16.gmra.mxu0 %v1258
    %v1396 = vpop.f32.mrf.mxu0
    %v1397 = vadd.f32 0.0, %v1396
    %v1398 = vpop.f32.mrf.mxu0
    %1399 = vdwg.mxu0
    %v1404 = vrot.slane %v1388, 2
    %v1405 = vrot.slane %v1390, 2
    %v1406 = vsel %vm276, %v1404, %v1405
    %v1407 = vrot.slane %v1394, 2
    %v1408 = vrot.slane %v1397, 2
    %v1409 = vsel %vm276, %v1407, %v1408
    %v1412 = vadd.f32 %v1343, %v1406
    %v1413 = vadd.f32 %v1344, %v1409
    %s1414 = scalar_lea.vmem [#allocation8], 96
    %v1415 = vld [vmem:[%s1414] sm:$0xf]
    %v1416 = vld [vmem:[%s1414 + $0x4] sm:$0xf]
    %v1417 = vld [vmem:[%s1414 + $0x8] sm:$0xf]
    %v1418 = vld [vmem:[%s1414 + $0xc] sm:$0xf]
    %v1419 = vld [vmem:[%s1414 + $0x10] sm:$0xf]
    %v1420 = vld [vmem:[%s1414 + $0x14] sm:$0xf]
    %v1421 = vld [vmem:[%s1414 + $0x18] sm:$0xf]
    %v1422 = vld [vmem:[%s1414 + $0x1c] sm:$0xf]
    %v1431 = vunpack.c.l.b16 %v1415
    %v1432 = vunpack.c.l.b16 %v1416
    %v1433 = vunpack.c.l.b16 %v1417
    %v1434 = vunpack.c.l.b16 %v1418
    %v1435 = vunpack.c.l.b16 %v1419
    %v1436 = vunpack.c.l.b16 %v1420
    %v1437 = vunpack.c.l.b16 %v1421
    %v1438 = vunpack.c.l.b16 %v1422
    %v1439 = vpack.c.b16 %v1432, %v1431
    %v1440 = vpack.c.b16 %v1434, %v1433
    %v1441 = vpack.c.b16 %v1436, %v1435
    %v1442 = vpack.c.b16 %v1438, %v1437
    %1447 = vmatpush.bf16.msra.mxu0 0
    %1448 = vmatpush.bf16.msra.mxu0 0
    %1449 = vmatpush.bf16.msra.mxu0 0
    %1450 = vmatpush.bf16.msra.mxu0 0
    %1451 = vmatpush.bf16.msra.mxu0 %v1442
    %1452 = vmatpush.bf16.msra.mxu0 %v1441
    %1453 = vmatpush.bf16.msra.mxu0 %v1440
    %1454 = vmatpush.bf16.msra.mxu0 %v1439
    %1455 = vmatmul.bf16.gmra.mxu0 %v1252
    %v1456 = vpop.f32.mrf.mxu0
    %v1457 = vadd.f32 0.0, %v1456
    %v1458 = vpop.f32.mrf.mxu0
    %v1459 = vadd.f32 0.0, %v1458
    %1460 = vmatmul.bf16.gmra.mxu0 %v1255
    %v1461 = vpop.f32.mrf.mxu0
    %v1462 = vpop.f32.mrf.mxu0
    %v1463 = vadd.f32 0.0, %v1462
    %1464 = vmatmul.bf16.gmra.mxu0 %v1258
    %v1465 = vpop.f32.mrf.mxu0
    %v1466 = vadd.f32 0.0, %v1465
    %v1467 = vpop.f32.mrf.mxu0
    %1468 = vdwg.mxu0
    %v1473 = vrot.slane %v1457, 3
    %v1474 = vrot.slane %v1459, 3
    %v1475 = vsel %vm339, %v1473, %v1474
    %v1476 = vrot.slane %v1463, 3
    %v1477 = vrot.slane %v1466, 3
    %v1478 = vsel %vm339, %v1476, %v1477
    %v1481 = vadd.f32 %v1412, %v1475
    %v1482 = vadd.f32 %v1413, %v1478
    %s1483 = scalar_lea.vmem [#allocation8], 128
    %v1484 = vld [vmem:[%s1483] sm:$0xf]
    %v1485 = vld [vmem:[%s1483 + $0x4] sm:$0xf]
    %v1486 = vld [vmem:[%s1483 + $0x8] sm:$0xf]
    %v1487 = vld [vmem:[%s1483 + $0xc] sm:$0xf]
    %v1488 = vld [vmem:[%s1483 + $0x10] sm:$0xf]
    %v1489 = vld [vmem:[%s1483 + $0x14] sm:$0xf]
    %v1490 = vld [vmem:[%s1483 + $0x18] sm:$0xf]
    %v1491 = vld [vmem:[%s1483 + $0x1c] sm:$0xf]
    %v1500 = vunpack.c.l.b16 %v1484
    %v1501 = vunpack.c.l.b16 %v1485
    %v1502 = vunpack.c.l.b16 %v1486
    %v1503 = vunpack.c.l.b16 %v1487
    %v1504 = vunpack.c.l.b16 %v1488
    %v1505 = vunpack.c.l.b16 %v1489
    %v1506 = vunpack.c.l.b16 %v1490
    %v1507 = vunpack.c.l.b16 %v1491
    %v1508 = vpack.c.b16 %v1501, %v1500
    %v1509 = vpack.c.b16 %v1503, %v1502
    %v1510 = vpack.c.b16 %v1505, %v1504
    %v1511 = vpack.c.b16 %v1507, %v1506
    %1516 = vmatpush.bf16.msra.mxu0 0
    %1517 = vmatpush.bf16.msra.mxu0 0
    %1518 = vmatpush.bf16.msra.mxu0 0
    %1519 = vmatpush.bf16.msra.mxu0 0
    %1520 = vmatpush.bf16.msra.mxu0 %v1511
    %1521 = vmatpush.bf16.msra.mxu0 %v1510
    %1522 = vmatpush.bf16.msra.mxu0 %v1509
    %1523 = vmatpush.bf16.msra.mxu0 %v1508
    %1524 = vmatmul.bf16.gmra.mxu0 %v1252
    %v1525 = vpop.f32.mrf.mxu0
    %v1526 = vadd.f32 0.0, %v1525
    %v1527 = vpop.f32.mrf.mxu0
    %v1528 = vadd.f32 0.0, %v1527
    %1529 = vmatmul.bf16.gmra.mxu0 %v1255
    %v1530 = vpop.f32.mrf.mxu0
    %v1531 = vpop.f32.mrf.mxu0
    %v1532 = vadd.f32 0.0, %v1531
    %1533 = vmatmul.bf16.gmra.mxu0 %v1258
    %v1534 = vpop.f32.mrf.mxu0
    %v1535 = vadd.f32 0.0, %v1534
    %v1536 = vpop.f32.mrf.mxu0
    %1537 = vdwg.mxu0
    %v1542 = vrot.slane %v1526, 4
    %v1543 = vrot.slane %v1528, 4
    %v1544 = vsel %vm402, %v1542, %v1543
    %v1545 = vrot.slane %v1532, 4
    %v1546 = vrot.slane %v1535, 4
    %v1547 = vsel %vm402, %v1545, %v1546
    %v1550 = vadd.f32 %v1481, %v1544
    %v1551 = vadd.f32 %v1482, %v1547
    %s1552 = scalar_lea.vmem [#allocation8], 160
    %v1553 = vld [vmem:[%s1552] sm:$0xf]
    %v1554 = vld [vmem:[%s1552 + $0x4] sm:$0xf]
    %v1555 = vld [vmem:[%s1552 + $0x8] sm:$0xf]
    %v1556 = vld [vmem:[%s1552 + $0xc] sm:$0xf]
    %v1557 = vld [vmem:[%s1552 + $0x10] sm:$0xf]
    %v1558 = vld [vmem:[%s1552 + $0x14] sm:$0xf]
    %v1559 = vld [vmem:[%s1552 + $0x18] sm:$0xf]
    %v1560 = vld [vmem:[%s1552 + $0x1c] sm:$0xf]
    %v1569 = vunpack.c.l.b16 %v1553
    %v1570 = vunpack.c.l.b16 %v1554
    %v1571 = vunpack.c.l.b16 %v1555
    %v1572 = vunpack.c.l.b16 %v1556
    %v1573 = vunpack.c.l.b16 %v1557
    %v1574 = vunpack.c.l.b16 %v1558
    %v1575 = vunpack.c.l.b16 %v1559
    %v1576 = vunpack.c.l.b16 %v1560
    %v1577 = vpack.c.b16 %v1570, %v1569
    %v1578 = vpack.c.b16 %v1572, %v1571
    %v1579 = vpack.c.b16 %v1574, %v1573
    %v1580 = vpack.c.b16 %v1576, %v1575
    %1585 = vmatpush.bf16.msra.mxu0 0
    %1586 = vmatpush.bf16.msra.mxu0 0
    %1587 = vmatpush.bf16.msra.mxu0 0
    %1588 = vmatpush.bf16.msra.mxu0 0
    %1589 = vmatpush.bf16.msra.mxu0 %v1580
    %1590 = vmatpush.bf16.msra.mxu0 %v1579
    %1591 = vmatpush.bf16.msra.mxu0 %v1578
    %1592 = vmatpush.bf16.msra.mxu0 %v1577
    %1593 = vmatmul.bf16.gmra.mxu0 %v1252
    %v1594 = vpop.f32.mrf.mxu0
    %v1595 = vadd.f32 0.0, %v1594
    %v1596 = vpop.f32.mrf.mxu0
    %v1597 = vadd.f32 0.0, %v1596
    %1598 = vmatmul.bf16.gmra.mxu0 %v1255
    %v1599 = vpop.f32.mrf.mxu0
    %v1600 = vpop.f32.mrf.mxu0
    %v1601 = vadd.f32 0.0, %v1600
    %1602 = vmatmul.bf16.gmra.mxu0 %v1258
    %v1603 = vpop.f32.mrf.mxu0
    %v1604 = vadd.f32 0.0, %v1603
    %v1605 = vpop.f32.mrf.mxu0
    %1606 = vdwg.mxu0
    %v1611 = vrot.slane %v1595, 5
    %v1612 = vrot.slane %v1597, 5
    %v1613 = vsel %vm465, %v1611, %v1612
    %v1614 = vrot.slane %v1601, 5
    %v1615 = vrot.slane %v1604, 5
    %v1616 = vsel %vm465, %v1614, %v1615
    %v1619 = vadd.f32 %v1550, %v1613
    %v1620 = vadd.f32 %v1551, %v1616
    %s1621 = scalar_lea.vmem [#allocation8], 192
    %v1622 = vld [vmem:[%s1621] sm:$0xf]
    %v1623 = vld [vmem:[%s1621 + $0x4] sm:$0xf]
    %v1624 = vld [vmem:[%s1621 + $0x8] sm:$0xf]
    %v1625 = vld [vmem:[%s1621 + $0xc] sm:$0xf]
    %v1626 = vld [vmem:[%s1621 + $0x10] sm:$0xf]
    %v1627 = vld [vmem:[%s1621 + $0x14] sm:$0xf]
    %v1628 = vld [vmem:[%s1621 + $0x18] sm:$0xf]
    %v1629 = vld [vmem:[%s1621 + $0x1c] sm:$0xf]
    %v1638 = vunpack.c.l.b16 %v1622
    %v1639 = vunpack.c.l.b16 %v1623
    %v1640 = vunpack.c.l.b16 %v1624
    %v1641 = vunpack.c.l.b16 %v1625
    %v1642 = vunpack.c.l.b16 %v1626
    %v1643 = vunpack.c.l.b16 %v1627
    %v1644 = vunpack.c.l.b16 %v1628
    %v1645 = vunpack.c.l.b16 %v1629
    %v1646 = vpack.c.b16 %v1639, %v1638
    %v1647 = vpack.c.b16 %v1641, %v1640
    %v1648 = vpack.c.b16 %v1643, %v1642
    %v1649 = vpack.c.b16 %v1645, %v1644
    %1654 = vmatpush.bf16.msra.mxu0 0
    %1655 = vmatpush.bf16.msra.mxu0 0
    %1656 = vmatpush.bf16.msra.mxu0 0
    %1657 = vmatpush.bf16.msra.mxu0 0
    %1658 = vmatpush.bf16.msra.mxu0 %v1649
    %1659 = vmatpush.bf16.msra.mxu0 %v1648
    %1660 = vmatpush.bf16.msra.mxu0 %v1647
    %1661 = vmatpush.bf16.msra.mxu0 %v1646
    %1662 = vmatmul.bf16.gmra.mxu0 %v1252
    %v1663 = vpop.f32.mrf.mxu0
    %v1664 = vadd.f32 0.0, %v1663
    %v1665 = vpop.f32.mrf.mxu0
    %v1666 = vadd.f32 0.0, %v1665
    %1667 = vmatmul.bf16.gmra.mxu0 %v1255
    %v1668 = vpop.f32.mrf.mxu0
    %v1669 = vpop.f32.mrf.mxu0
    %v1670 = vadd.f32 0.0, %v1669
    %1671 = vmatmul.bf16.gmra.mxu0 %v1258
    %v1672 = vpop.f32.mrf.mxu0
    %v1673 = vadd.f32 0.0, %v1672
    %v1674 = vpop.f32.mrf.mxu0
    %1675 = vdwg.mxu0
    %v1680 = vrot.slane %v1664, 6
    %v1681 = vrot.slane %v1666, 6
    %v1682 = vsel %vm528, %v1680, %v1681
    %v1683 = vrot.slane %v1670, 6
    %v1684 = vrot.slane %v1673, 6
    %v1685 = vsel %vm528, %v1683, %v1684
    %v1688 = vadd.f32 %v1619, %v1682
    %v1689 = vadd.f32 %v1620, %v1685
    %s1690 = scalar_lea.vmem [#allocation8], 224
    %v1691 = vld [vmem:[%s1690] sm:$0xf]
    %v1692 = vld [vmem:[%s1690 + $0x4] sm:$0xf]
    %v1693 = vld [vmem:[%s1690 + $0x8] sm:$0xf]
    %v1694 = vld [vmem:[%s1690 + $0xc] sm:$0xf]
    %v1695 = vld [vmem:[%s1690 + $0x10] sm:$0xf]
    %v1696 = vld [vmem:[%s1690 + $0x14] sm:$0xf]
    %v1697 = vld [vmem:[%s1690 + $0x18] sm:$0xf]
    %v1698 = vld [vmem:[%s1690 + $0x1c] sm:$0xf]
    %v1707 = vunpack.c.l.b16 %v1691
    %v1708 = vunpack.c.l.b16 %v1692
    %v1709 = vunpack.c.l.b16 %v1693
    %v1710 = vunpack.c.l.b16 %v1694
    %v1711 = vunpack.c.l.b16 %v1695
    %v1712 = vunpack.c.l.b16 %v1696
    %v1713 = vunpack.c.l.b16 %v1697
    %v1714 = vunpack.c.l.b16 %v1698
    %v1715 = vpack.c.b16 %v1708, %v1707
    %v1716 = vpack.c.b16 %v1710, %v1709
    %v1717 = vpack.c.b16 %v1712, %v1711
    %v1718 = vpack.c.b16 %v1714, %v1713
    %1723 = vmatpush.bf16.msra.mxu0 0
    %1724 = vmatpush.bf16.msra.mxu0 0
    %1725 = vmatpush.bf16.msra.mxu0 0
    %1726 = vmatpush.bf16.msra.mxu0 0
    %1727 = vmatpush.bf16.msra.mxu0 %v1718
    %1728 = vmatpush.bf16.msra.mxu0 %v1717
    %1729 = vmatpush.bf16.msra.mxu0 %v1716
    %1730 = vmatpush.bf16.msra.mxu0 %v1715
    %1731 = vmatmul.bf16.gmra.mxu0 %v1252
    %v1732 = vpop.f32.mrf.mxu0
    %v1733 = vadd.f32 0.0, %v1732
    %v1734 = vpop.f32.mrf.mxu0
    %v1735 = vadd.f32 0.0, %v1734
    %1736 = vmatmul.bf16.gmra.mxu0 %v1255
    %v1737 = vpop.f32.mrf.mxu0
    %v1738 = vpop.f32.mrf.mxu0
    %v1739 = vadd.f32 0.0, %v1738
    %1740 = vmatmul.bf16.gmra.mxu0 %v1258
    %v1741 = vpop.f32.mrf.mxu0
    %v1742 = vadd.f32 0.0, %v1741
    %v1743 = vpop.f32.mrf.mxu0
    %1744 = vdwg.mxu0
    %v1749 = vrot.slane %v1733, 7
    %v1750 = vrot.slane %v1735, 7
    %v1751 = vsel %vm591, %v1749, %v1750
    %v1752 = vrot.slane %v1739, 7
    %v1753 = vrot.slane %v1742, 7
    %v1754 = vsel %vm591, %v1752, %v1753
    %v1757 = vadd.f32 %v1688, %v1751
    %v1758 = vadd.f32 %v1689, %v1754
    %v1759 = vld [vmem:[%s4 + $0x2] sm:$0x1]
    %v1760 = vperm.slane %v1759, 0
    %v1761 = vadd.f32 %v1757, %v1760
    %v1762 = vadd.f32 %v1758, %v1760
    %v1763 = vmax.f32 %v1761, 0.0
    %v1764 = vmax.f32 %v1762, 0.0
    %v1766 = vrot.slane %v1763, 7
    %v1768 = vsel %vm591, 0.0, %v1766
    %1769 = vst [vmem:[#allocation4] sm:$0xff] %v1768
    %v1771 = vrot.slane %v1764, 7
    %v1773 = vsel %vm591, 0.0, %v1771
    %1774 = vst [vmem:[#allocation4 + $0x18] sm:$0xff] %v1773
    %v1775 = vld [vmem:[#allocation4] ss:$2 sm:$0xff]
    %v1776 = vld [vmem:[%s660] ss:$2 sm:$0xff]
    %v1777 = vld [vmem:[%s664] ss:$2 sm:$0xff]
    %v1778 = vld [vmem:[%s666] ss:$2 sm:$0xff]
    %v1779 = vmax.f32 %v1775, %v1777
    %v1780 = vmax.f32 %v1776, %v1778
    %1781 = vst [vmem:[%s9] sm:$0xf] %v1779
    %1782 = vst [vmem:[%s9] sm:$0xf0] %v1780
    %v1784 = vrot.slane %v1779, 1
    %1785 = vrot.lane.b32.xlu0 %v1784, 16
    %v1786 = vpop.permute.xlu0 %1785
    %v1788 = vrot.slane %v1779, 2
    %1789 = vrot.lane.b32.xlu0 %v1788, 32
    %v1790 = vpop.permute.xlu0 %1789
    %v1792 = vrot.slane %v1779, 3
    %1793 = vrot.lane.b32.xlu0 %v1792, 48
    %v1794 = vpop.permute.xlu0 %1793
    %v1796 = vsel %vm140, %v1779, %v1786
    %v1797 = vsel %vm702, %v1796, %v1790
    %vm1798 = vcmask 392192
    %v1799 = vsel %vm1798, %v1797, %v1794
    %v1801 = vrot.slane %v1780, 1
    %1802 = vrot.lane.b32.xlu0 %v1801, 16
    %v1803 = vpop.permute.xlu0 %1802
    %v1805 = vrot.slane %v1780, 2
    %1806 = vrot.lane.b32.xlu0 %v1805, 32
    %v1807 = vpop.permute.xlu0 %1806
    %v1809 = vrot.slane %v1780, 3
    %1810 = vrot.lane.b32.xlu0 %v1809, 48
    %v1811 = vpop.permute.xlu0 %1810
    %v1813 = vsel %vm140, %v1780, %v1803
    %v1814 = vsel %vm702, %v1813, %v1807
    %v1815 = vsel %vm1798, %v1814, %v1811
    %v1817 = vrot.slane %v1815, 3
    %v1819 = vsel %vm591, %v1799, %v1817
    %v1820 = vpack.c.bf16 %v1819, %v1819
    %v1821 = vld [vmem:[#allocation10] sm:$0xff]
    %v1822 = vld [vmem:[#allocation10 + $0x8] sm:$0xff]
    %v1823 = vld [vmem:[#allocation10 + $0x10] sm:$0xff]
    %v1824 = vld [vmem:[#allocation10 + $0x18] sm:$0xff]
    %v1825 = vld [vmem:[#allocation10 + $0x20] sm:$0xff]
    %v1826 = vld [vmem:[#allocation10 + $0x28] sm:$0xff]
    %v1827 = vld [vmem:[#allocation10 + $0x30] sm:$0xff]
    %v1828 = vld [vmem:[#allocation10 + $0x38] sm:$0xff]
    %v1829 = vld [vmem:[%s6] sm:$0x3]
    %v1831 = vperm.slane %v1829, 0
    %v1832 = vperm.slane %v1829, 1
    %v1843 = vunpack.c.l.b16 %v1821
    %v1844 = vunpack.c.h.b16 %v1821
    %v1845 = vunpack.c.l.b16 %v1822
    %v1846 = vunpack.c.h.b16 %v1822
    %v1847 = vunpack.c.l.b16 %v1823
    %v1848 = vunpack.c.h.b16 %v1823
    %v1849 = vunpack.c.l.b16 %v1824
    %v1850 = vunpack.c.h.b16 %v1824
    %v1851 = vunpack.c.l.b16 %v1825
    %v1852 = vunpack.c.h.b16 %v1825
    %v1853 = vunpack.c.l.b16 %v1826
    %v1854 = vunpack.c.h.b16 %v1826
    %v1855 = vunpack.c.l.b16 %v1827
    %v1856 = vunpack.c.h.b16 %v1827
    %v1857 = vunpack.c.l.b16 %v1828
    %v1858 = vunpack.c.h.b16 %v1828
    %v1859 = vpack.c.b16 %v1845, %v1843
    %v1860 = vpack.c.b16 %v1846, %v1844
    %v1861 = vpack.c.b16 %v1849, %v1847
    %v1862 = vpack.c.b16 %v1850, %v1848
    %v1863 = vpack.c.b16 %v1853, %v1851
    %v1864 = vpack.c.b16 %v1854, %v1852
    %v1865 = vpack.c.b16 %v1857, %v1855
    %v1866 = vpack.c.b16 %v1858, %v1856
    %v1876 = vsel %vm1250, %v1820, 0
    %1878 = vmatpush.bf16.msra.mxu0 0
    %1879 = vmatpush.bf16.msra.mxu0 0
    %1880 = vmatpush.bf16.msra.mxu0 0
    %1881 = vmatpush.bf16.msra.mxu0 0
    %1882 = vmatpush.bf16.msra.mxu0 %v1865
    %1883 = vmatpush.bf16.msra.mxu0 %v1863
    %1884 = vmatpush.bf16.msra.mxu0 %v1861
    %1885 = vmatpush.bf16.msra.mxu0 %v1859
    %1886 = vmatmul.bf16.gmra.mxu0 %v1876
    %v1887 = vpop.f32.mrf.mxu0
    %v1888 = vadd.f32 %v1831, %v1887
    %v1889 = vpop.f32.mrf.mxu0
    %1890 = vdwg.mxu0
    %1891 = vmatpush.bf16.msra.mxu0 0
    %1892 = vmatpush.bf16.msra.mxu0 0
    %1893 = vmatpush.bf16.msra.mxu0 0
    %1894 = vmatpush.bf16.msra.mxu0 0
    %1895 = vmatpush.bf16.msra.mxu0 %v1866
    %1896 = vmatpush.bf16.msra.mxu0 %v1864
    %1897 = vmatpush.bf16.msra.mxu0 %v1862
    %1898 = vmatpush.bf16.msra.mxu0 %v1860
    %1899 = vmatmul.bf16.gmra.mxu0 %v1876
    %v1900 = vpop.f32.mrf.mxu0
    %v1901 = vadd.f32 %v1832, %v1900
    %v1902 = vpop.f32.mrf.mxu0
    %1903 = vdwg.mxu0
    %v1904 = vmax.f32 %v1888, 0.0
    %v1905 = vmax.f32 %v1901, 0.0
    %v1906 = vpack.c.bf16 %v1904, %v1904
    %v1907 = vpack.c.bf16 %v1905, %v1905
    %v1908 = vld [vmem:[#allocation11] sm:$0xf]
    %v1909 = vld [vmem:[#allocation11 + $0x4] sm:$0xf]
    %v1910 = vld [vmem:[#allocation11 + $0x8] sm:$0xf]
    %v1911 = vld [vmem:[#allocation11 + $0xc] sm:$0xf]
    %v1912 = vld [vmem:[#allocation11 + $0x10] sm:$0xf]
    %v1913 = vld [vmem:[#allocation11 + $0x14] sm:$0xf]
    %v1914 = vld [vmem:[#allocation11 + $0x18] sm:$0xf]
    %v1915 = vld [vmem:[#allocation11 + $0x1c] sm:$0xf]
    %v1916 = vld [vmem:[#allocation11 + $0x20] sm:$0xf]
    %v1917 = vld [vmem:[#allocation11 + $0x24] sm:$0xf]
    %v1918 = vld [vmem:[#allocation11 + $0x28] sm:$0xf]
    %v1919 = vld [vmem:[#allocation11 + $0x2c] sm:$0xf]
    %v1920 = vld [vmem:[#allocation11 + $0x30] sm:$0xf]
    %v1921 = vld [vmem:[#allocation11 + $0x34] sm:$0xf]
    %v1922 = vld [vmem:[#allocation11 + $0x38] sm:$0xf]
    %v1923 = vld [vmem:[#allocation11 + $0x3c] sm:$0xf]
    %v1924 = vld [vmem:[#allocation11 + $0x40] sm:$0xf]
    %v1925 = vld [vmem:[#allocation11 + $0x44] sm:$0xf]
    %v1926 = vld [vmem:[#allocation11 + $0x48] sm:$0xf]
    %v1927 = vld [vmem:[#allocation11 + $0x4c] sm:$0xf]
    %v1928 = vld [vmem:[#allocation11 + $0x50] sm:$0xf]
    %v1929 = vld [vmem:[#allocation11 + $0x54] sm:$0xf]
    %v1930 = vld [vmem:[#allocation11 + $0x58] sm:$0xf]
    %v1931 = vld [vmem:[#allocation11 + $0x5c] sm:$0xf]
    %v1932 = vld [vmem:[#allocation11 + $0x60] sm:$0xf]
    %v1933 = vld [vmem:[#allocation11 + $0x64] sm:$0xf]
    %v1934 = vld [vmem:[#allocation11 + $0x68] sm:$0xf]
    %v1935 = vld [vmem:[#allocation11 + $0x6c] sm:$0xf]
    %v1936 = vld [vmem:[#allocation11 + $0x70] sm:$0xf]
    %v1937 = vld [vmem:[#allocation11 + $0x74] sm:$0xf]
    %v1938 = vld [vmem:[#allocation11 + $0x78] sm:$0xf]
    %v1939 = vld [vmem:[#allocation11 + $0x7c] sm:$0xf]
    %v1940 = vld [vmem:[%s8] sm:$0x1]
    %v1942 = vperm.slane %v1940, 0
    %v1976 = vunpack.c.l.b16 %v1908
    %v1977 = vunpack.c.l.b16 %v1909
    %v1978 = vunpack.c.l.b16 %v1910
    %v1979 = vunpack.c.l.b16 %v1911
    %v1980 = vunpack.c.l.b16 %v1912
    %v1981 = vunpack.c.l.b16 %v1913
    %v1982 = vunpack.c.l.b16 %v1914
    %v1983 = vunpack.c.l.b16 %v1915
    %v1984 = vunpack.c.l.b16 %v1916
    %v1985 = vunpack.c.l.b16 %v1917
    %v1986 = vunpack.c.l.b16 %v1918
    %v1987 = vunpack.c.l.b16 %v1919
    %v1988 = vunpack.c.l.b16 %v1920
    %v1989 = vunpack.c.l.b16 %v1921
    %v1990 = vunpack.c.l.b16 %v1922
    %v1991 = vunpack.c.l.b16 %v1923
    %v1992 = vunpack.c.l.b16 %v1924
    %v1993 = vunpack.c.l.b16 %v1925
    %v1994 = vunpack.c.l.b16 %v1926
    %v1995 = vunpack.c.l.b16 %v1927
    %v1996 = vunpack.c.l.b16 %v1928
    %v1997 = vunpack.c.l.b16 %v1929
    %v1998 = vunpack.c.l.b16 %v1930
    %v1999 = vunpack.c.l.b16 %v1931
    %v2000 = vunpack.c.l.b16 %v1932
    %v2001 = vunpack.c.l.b16 %v1933
    %v2002 = vunpack.c.l.b16 %v1934
    %v2003 = vunpack.c.l.b16 %v1935
    %v2004 = vunpack.c.l.b16 %v1936
    %v2005 = vunpack.c.l.b16 %v1937
    %v2006 = vunpack.c.l.b16 %v1938
    %v2007 = vunpack.c.l.b16 %v1939
    %v2008 = vpack.c.b16 %v1977, %v1976
    %v2009 = vpack.c.b16 %v1979, %v1978
    %v2010 = vpack.c.b16 %v1981, %v1980
    %v2011 = vpack.c.b16 %v1983, %v1982
    %v2012 = vpack.c.b16 %v1985, %v1984
    %v2013 = vpack.c.b16 %v1987, %v1986
    %v2014 = vpack.c.b16 %v1989, %v1988
    %v2015 = vpack.c.b16 %v1991, %v1990
    %v2016 = vpack.c.b16 %v1993, %v1992
    %v2017 = vpack.c.b16 %v1995, %v1994
    %v2018 = vpack.c.b16 %v1997, %v1996
    %v2019 = vpack.c.b16 %v1999, %v1998
    %v2020 = vpack.c.b16 %v2001, %v2000
    %v2021 = vpack.c.b16 %v2003, %v2002
    %v2022 = vpack.c.b16 %v2005, %v2004
    %v2023 = vpack.c.b16 %v2007, %v2006
    %2040 = vmatpush.bf16.msra.mxu0 %v2015
    %2041 = vmatpush.bf16.msra.mxu0 %v2014
    %2042 = vmatpush.bf16.msra.mxu0 %v2013
    %2043 = vmatpush.bf16.msra.mxu0 %v2012
    %2044 = vmatpush.bf16.msra.mxu0 %v2011
    %2045 = vmatpush.bf16.msra.mxu0 %v2010
    %2046 = vmatpush.bf16.msra.mxu0 %v2009
    %2047 = vmatpush.bf16.msra.mxu0 %v2008
    %2048 = vmatmul.bf16.gmra.mxu0 %v1906
    %v2049 = vpop.f32.mrf.mxu0
    %v2050 = vadd.f32 %v1942, %v2049
    %v2051 = vpop.f32.mrf.mxu0
    %2052 = vdwg.mxu0
    %2053 = vmatpush.bf16.msra.mxu0 %v2023
    %2054 = vmatpush.bf16.msra.mxu0 %v2022
    %2055 = vmatpush.bf16.msra.mxu0 %v2021
    %2056 = vmatpush.bf16.msra.mxu0 %v2020
    %2057 = vmatpush.bf16.msra.mxu0 %v2019
    %2058 = vmatpush.bf16.msra.mxu0 %v2018
    %2059 = vmatpush.bf16.msra.mxu0 %v2017
    %2060 = vmatpush.bf16.msra.mxu0 %v2016
    %2061 = vmatmul.bf16.gmra.mxu0 %v1907
    %v2062 = vpop.f32.mrf.mxu0
    %v2063 = vadd.f32 %v2050, %v2062
    %v2064 = vpop.f32.mrf.mxu0
    %2065 = vdwg.mxu0
    %2066 = vst [vmem:[#allocation13] sm:$0x3] %v2063
    // Predicated region
    $region54: #{tfc_forward.1} parent=1 // pred_check
      _
    $region55: #{tfc_forward.1} parent=1 // pred_check_branch
      %2068 = sbr.rel (0) target = $region57
    $region56: #{tfc_forward.1} parent=1 // pred_region
      _
    $region57: #{tfc_forward.1} parent=1 // pred_fallthru
      _
    // Predicated region
    $region58: #{tfc_forward.1} parent=1 // pred_check
      _
    $region59: #{tfc_forward.1} parent=1 // pred_check_branch
      %2070 = sbr.rel (0) target = $region61
    $region60: #{tfc_forward.1} parent=1 // pred_region
      %2072 = vsyncadd [#allocation7], 0
      %s2074 = sshll.u32 [#allocation13], 4
      %s2075 = int_to_ptr.vmem [resolvable:$true] %s2074
      %s2076 = sshll.u32 %s10, 4
      %s2077 = int_to_ptr.hbm [resolvable:$true] %s2076
      %2079 = dma.vmem_to_hbm [thread:$0]  %s2075, 32, %s2077, [#allocation7]
    $region61: #{tfc_forward.1} parent=1 // pred_fallthru
      _
    // Predicated region
    $region62: #{tfc_forward.1} parent=1 // pred_check
      _
    $region63: #{tfc_forward.1} parent=1 // pred_check_branch
      %2081 = sbr.rel (0) target = $region65
    $region64: #{tfc_forward.1} parent=1 // pred_region
      _
    $region65: #{tfc_forward.1} parent=1 // pred_fallthru
      _
    // Predicated region
    $region66: #{tfc_forward.1} parent=1 // pred_check
      _
    $region67: #{tfc_forward.1} parent=1 // pred_check_branch
      %2083 = sbr.rel (0) target = $region69
    $region68: #{tfc_forward.1} parent=1 // pred_region
      %2085 = dma.done [#allocation7], 32
    $region69: #{tfc_forward.1} parent=1 // pred_fallthru
      _
    %2086 = vsyncpa [#allocation6], 1
    %2087 = vsyncpa [#allocation9], 1
    %2088 = vsyncpa [#allocation12], 1
    %2089 = vsyncpa [#allocation7], 1

</llo_original>
